<compile_context>
chip_gen: v7x
topology: tpu7x:2x2x1
jax: 0.10.0
libtpu: 0.0.40
codegen_flags: <defaults>
</compile_context>

<pallas_src>
import functools

import jax
import jax.numpy as jnp
import numpy as np
from jax.experimental import pallas as pl
from jax.experimental.pallas import tpu as pltpu


RAY_CHANNELS = 3 * 16 * 2 + 3      # FourierPositionEncoding(n=3, num_bands=16) -> 99
RAY_CHANNELS_PADDED = 128          # zero-padded to a clean lane / MXU-K width


# ---------------- glue: fourier ray embeddings (channels-first) ---------------

def _fourier_ray_embeddings_cf(K, h, w, patch_size, num_bands=16,
                               max_resolution=64,
                               out_channels=RAY_CHANNELS_PADDED,
                               dtype=jnp.bfloat16):
    """points grid -> inverse_perspective_projection -> fourier encoding.

    Channels-first: returns (B, out_channels, h*w); channels past 99 are zero.
    Tiny and data-independent, so it stays in plain JAX (also keeps the sin/cos
    off the kernel's single EUP slot, which matters on compute-bound v5e).
    """
    B = K.shape[0]
    N = h * w
    ii = jnp.arange(h, dtype=jnp.float32)
    jj = jnp.arange(w, dtype=jnp.float32)
    # points[i, j] = (i, j) (row, col), matching torch.stack([row, col], -1)
    pts = jnp.stack(jnp.meshgrid(ii, jj, indexing="ij"), axis=-1)         # (h, w, 2)
    pts = pts * patch_size + patch_size // 2
    pts = pts.reshape(N, 2)
    pts_h = jnp.concatenate([pts, jnp.ones((N, 1), jnp.float32)], axis=-1)  # (N, 3)

    Kinv = jnp.linalg.inv(K)                                               # (B, 3, 3)
    rays = jnp.einsum("bij,nj->bin", Kinv, pts_h)                          # (B, 3, N)

    fb = jnp.linspace(1.0, max_resolution / 2.0, num_bands, dtype=jnp.float32)
    f = rays[:, :, None, :] * fb[None, None, :, None]                      # (B, 3, nb, N)
    f = f.reshape(B, 3 * num_bands, N)
    emb = jnp.concatenate(
        [rays, jnp.sin(jnp.pi * f), jnp.cos(jnp.pi * f)], axis=1)          # (B, 99, N)
    C = emb.shape[1]
    if out_channels > C:
        emb = jnp.concatenate(
            [emb, jnp.zeros((B, out_channels - C, N), jnp.float32)], axis=1)
    return emb.astype(dtype)


# ------------------------------ Pallas kernel --------------------------------

def _camera_enc_kernel(feat_ref, rays_ref, wf_ref, wr_ref, g_ref, b_ref, o_ref,
                       *, eps):
    # feat_ref: (D, TN) input dtype     rays_ref: (Crp, TN) bf16
    # wf_ref:   (Cout, D) bf16          wr_ref:   (Cout, Crp) bf16
    # g_ref/b_ref: (Cout, 1) f32        o_ref:    (Cout, TN)
    feat = feat_ref[...].astype(jnp.bfloat16)          # cast in-register, no HBM pass
    z = jnp.dot(wf_ref[...], feat, preferred_element_type=jnp.float32)
    z = z + jnp.dot(wr_ref[...], rays_ref[...], preferred_element_type=jnp.float32)

    # LayerNorm2d: normalize over channels (sublane axis 0) per spatial column.
    mean = jnp.mean(z, axis=0, keepdims=True)          # (1, TN)
    d = z - mean
    var = jnp.mean(d * d, axis=0, keepdims=True)       # two-pass variance (stable)
    inv = jax.lax.rsqrt(var + eps)
    # Folded epilogue: o = (z - mean) * (gamma * inv) + beta  -- one FMA pass.
    o_ref[...] = (d * (g_ref[...] * inv) + b_ref[...]).astype(o_ref.dtype)


def conv1x1_layernorm_cf(feat_bdn, rays_cf, w_feat_t, w_rays_t, gamma, beta, *,
                         eps=1e-6, tile_n=1024, out_dtype=None,
                         vmem_limit_bytes=48 * 1024 * 1024):
    """Fused 1x1 conv + channel LayerNorm, channels-first.

    feat_bdn: (B, D, N)   NCHW flattened; any float dtype (cast to bf16 in-kernel)
    rays_cf:  (B, Crp, N) bf16 zero-padded ray fourier features (Crp = 128)
    w_feat_t: (Cout, D) bf16, w_rays_t: (Cout, Crp) bf16  (split conv weight)
    gamma/beta: (Cout, 1) f32
    Returns (B, Cout, N) in `out_dtype` (default: feat_bdn.dtype).
    NOTE: Cout is never tiled (the LayerNorm reduction spans all channels).
    """
    B, D, N = feat_bdn.shape
    Crp = rays_cf.shape[1]
    Cout = w_feat_t.shape[0]
    out_dtype = feat_bdn.dtype if out_dtype is None else out_dtype

    # Spatial tile = lane (last) dim of every block: multiple of 128 unless it
    # covers the full spatial extent.
    if N <= tile_n:
        tn = N
    else:
        tn = (tile_n // 128) * 128
        assert tn >= 128, f"tile_n={tile_n} too small for a tiled spatial axis"
    pad = (-N) % tn
    Np = N + pad
    if pad:  # fallback for resolutions where h*w is not a multiple of tile_n
        feat_bdn = jnp.pad(feat_bdn, ((0, 0), (0, 0), (0, pad)))
        rays_cf = jnp.pad(rays_cf, ((0, 0), (0, 0), (0, pad)))

    kernel = functools.partial(_camera_enc_kernel, eps=eps)

    def _call(single_buffer_invariants):
        sq = pl.Squeezed()
        inv_kw = (dict(pipeline_mode=pl.Buffered(1))
                  if single_buffer_invariants else {})
        return pl.pallas_call(
            kernel,
            out_shape=jax.ShapeDtypeStruct((B, Cout, Np), out_dtype),
            grid=(B, Np // tn),
            in_specs=[
                pl.BlockSpec((sq, D, tn), lambda b, n: (b, 0, n)),
                pl.BlockSpec((sq, Crp, tn), lambda b, n: (b, 0, n)),
                pl.BlockSpec((Cout, D), lambda b, n: (0, 0), **inv_kw),
                pl.BlockSpec((Cout, Crp), lambda b, n: (0, 0), **inv_kw),
                pl.BlockSpec((Cout, 1), lambda b, n: (0, 0), **inv_kw),
                pl.BlockSpec((Cout, 1), lambda b, n: (0, 0), **inv_kw),
            ],
            out_specs=pl.BlockSpec((sq, Cout, tn), lambda b, n: (b, 0, n)),
            compiler_params=pltpu.CompilerParams(
                dimension_semantics=("parallel", "parallel"),
                vmem_limit_bytes=vmem_limit_bytes,
            ),
        )(feat_bdn, rays_cf, w_feat_t, w_rays_t, gamma, beta)

    try:
        # Single-buffer the grid-invariant operands (index_map is constant):
        # frees ~2.3 MiB at D=Cout=1024, which matters on v7x's 64 MiB VMEM.
        out = _call(True)
    except Exception:  # pragma: no cover -- JAX build without Buffered(1) support
        out = _call(False)

    if pad:
        out = out[..., :N]
    return out


# ------------------------------ CameraEncoder --------------------------------

class CameraEncoderPallas:
    """Synthetic-weight JAX/Pallas port of CameraEncoder.

    embed_dim is parameterized (the PyTorch module hardcodes 1024) so the demo
    can run at a small size; semantics are identical.
    """

    def __init__(self, patch_size=14, embed_dim=32, seed=0, tile_n=1024,
                 out_dtype=None):
        self.patch_size = patch_size
        self.embed_dim = embed_dim
        self.tile_n = tile_n
        # None -> match input dtype; pass jnp.bfloat16 to halve the kernel's
        # HBM writes on the mem-bound v6e/v7x if downstream tolerates it.
        self.out_dtype = out_dtype

        cin = embed_dim + RAY_CHANNELS
        key = jax.random.PRNGKey(seed)
        # Conv2d(cin, embed_dim, 1, bias=False): weight (Cout, Cin) -- already
        # the layout the channels-first kernel needs (z^T = W @ x^T); split so
        # the feat/rays concat is never materialized, pad the ray half to 128.
        w = jax.random.normal(key, (embed_dim, cin), dtype=jnp.float32) * 0.02
        self.w_feat_t = w[:, :embed_dim].astype(jnp.bfloat16)           # (Cout, D)
        w_rays = jnp.pad(w[:, embed_dim:],
                         ((0, 0), (0, RAY_CHANNELS_PADDED - RAY_CHANNELS)))
        self.w_rays_t = w_rays.astype(jnp.bfloat16)                     # (Cout, 128)
        # LayerNorm2d(embed_dim): weight ones, bias zeros (as in __init__)
        self.ln_w = jnp.ones((embed_dim, 1), jnp.float32)
        self.ln_b = jnp.zeros((embed_dim, 1), jnp.float32)

    def __call__(self, img_embeddings, K):
        # img_embeddings: (B, D, h, w) NCHW;  K: (B, 3, 3)
        B, D, h, w = img_embeddings.shape
        assert D == self.embed_dim
        N = h * w
        rays_cf = _fourier_ray_embeddings_cf(K, h, w, self.patch_size)  # (B,128,N) bf16
        feat = img_embeddings.reshape(B, D, N)     # free reshape, stays channels-first
        out = conv1x1_layernorm_cf(
            feat, rays_cf, self.w_feat_t, self.w_rays_t, self.ln_w, self.ln_b,
            tile_n=self.tile_n, out_dtype=self.out_dtype)               # (B, D, N)
        return out.reshape(B, D, h, w)                                  # NCHW, no transpose


# --------------------------------- reference ----------------------------------

def _reference(img_embeddings, K, enc: CameraEncoderPallas):
    B, D, h, w = img_embeddings.shape
    N = h * w
    rays = _fourier_ray_embeddings_cf(K, h, w, enc.patch_size,
                                      out_channels=RAY_CHANNELS,
                                      dtype=jnp.float32)                 # (B, 99, N)
    x = jnp.concatenate([img_embeddings.reshape(B, D, N), rays], axis=1)  # (B, Cin, N)
    w_full = jnp.concatenate(
        [enc.w_feat_t, enc.w_rays_t[:, :RAY_CHANNELS]], axis=1)          # (Cout, Cin)
    z = jnp.einsum("oc,bcn->bon", w_full, x.astype(jnp.bfloat16),
                   preferred_element_type=jnp.float32)
    mu = jnp.mean(z, axis=1, keepdims=True)
    var = jnp.mean(jnp.square(z - mu), axis=1, keepdims=True)
    zn = (z - mu) / jnp.sqrt(var + 1e-6)
    zn = zn * enc.ln_w[None] + enc.ln_b[None]
    return zn.reshape(B, D, h, w).astype(img_embeddings.dtype)


if __name__ == "__main__":
    key = jax.random.PRNGKey(0)
    k1, k2 = jax.random.split(key)

    def make_K(B):
        fx = 500.0 + 20.0 * jnp.arange(B, dtype=jnp.float32)
        cx = 56.0 + 4.0 * jnp.arange(B, dtype=jnp.float32)
        z = jnp.zeros((B,), jnp.float32)
        o = jnp.ones((B,), jnp.float32)
        return jnp.stack([jnp.stack([fx, z, cx], axis=-1),
                          jnp.stack([z, fx, cx], axis=-1),
                          jnp.stack([z, z, o], axis=-1)], axis=1)

    # Small demo: single spatial tile per batch element.
    B, D, h, w = 2, 32, 8, 8
    img = jax.random.normal(k1, (B, D, h, w), dtype=jnp.float32)
    K = make_K(B)
    enc = CameraEncoderPallas(patch_size=14, embed_dim=D, seed=0)
    out = jax.block_until_ready(enc(img, K))
    ref = jax.block_until_ready(_reference(img, K, enc))
    # bf16 matmul operands (f32 accumulation) => slightly looser tolerance.
    np.testing.assert_allclose(np.asarray(out, np.float32),
                               np.asarray(ref, np.float32),
                               rtol=2e-3, atol=2e-3)
    assert out.shape == (B, D, h, w)

    # Multi-tile spatial grid (exercises the tiled-N path: N=256, tn=128).
    h2 = w2 = 16
    img2 = jax.random.normal(k2, (B, D, h2, w2), dtype=jnp.float32)
    enc2 = CameraEncoderPallas(patch_size=14, embed_dim=D, seed=0, tile_n=128)
    out2 = jax.block_until_ready(enc2(img2, K))
    ref2 = jax.block_until_ready(_reference(img2, K, enc2))
    np.testing.assert_allclose(np.asarray(out2, np.float32),
                               np.asarray(ref2, np.float32),
                               rtol=2e-3, atol=2e-3)
    assert out2.shape == (B, D, h2, w2)

    print("KERNEL_OK")
</pallas_src>

<mosaic_0001>
module attributes {stable_mosaic.version = 11 : i64} {
  func.func @_camera_enc_kernel(%arg0: i32, %arg1: i32, %arg2: memref<1x32x64xf32, #tpu.memory_space<vmem>>, %arg3: memref<1x128x64xbf16, #tpu.memory_space<vmem>>, %arg4: memref<32x32xbf16, #tpu.memory_space<vmem>>, %arg5: memref<32x128xbf16, #tpu.memory_space<vmem>>, %arg6: memref<32x1xf32, #tpu.memory_space<vmem>>, %arg7: memref<32x1xf32, #tpu.memory_space<vmem>>, %arg8: memref<1x32x64xf32, #tpu.memory_space<vmem>>) attributes {dimension_semantics = [#tpu.dimension_semantics<parallel>, #tpu.dimension_semantics<parallel>], iteration_bounds = array<i64: 2, 1>, scalar_prefetch = 0 : i64, scratch_operands = 0 : i64, tpu.core_type = #tpu.core_type<tc>, window_params = [{transform_indices = @transform_0, window_bounds = array<i64: 1, 32, 64>}, {transform_indices = @transform_1, window_bounds = array<i64: 1, 128, 64>}, {pipeline_mode = #tpu.pipeline_mode<synchronous>, transform_indices = @transform_2, window_bounds = array<i64: 32, 32>}, {pipeline_mode = #tpu.pipeline_mode<synchronous>, transform_indices = @transform_3, window_bounds = array<i64: 32, 128>}, {pipeline_mode = #tpu.pipeline_mode<synchronous>, transform_indices = @transform_4, window_bounds = array<i64: 32, 1>}, {pipeline_mode = #tpu.pipeline_mode<synchronous>, transform_indices = @transform_5, window_bounds = array<i64: 32, 1>}, {transform_indices = @transform_6, window_bounds = array<i64: 1, 32, 64>}]} {
    %c0 = arith.constant 0 : index
    %c0_0 = arith.constant 0 : index
    %c0_1 = arith.constant 0 : index
    %0 = vector.load %arg2[%c0, %c0_0, %c0_1] : memref<1x32x64xf32, #tpu.memory_space<vmem>>, vector<1x32x64xf32>
    %1 = vector.shape_cast %0 : vector<1x32x64xf32> to vector<32x64xf32>
    %2 = arith.truncf %1 : vector<32x64xf32> to vector<32x64xbf16>
    %c0_2 = arith.constant 0 : index
    %c0_3 = arith.constant 0 : index
    %3 = vector.load %arg4[%c0_2, %c0_3] : memref<32x32xbf16, #tpu.memory_space<vmem>>, vector<32x32xbf16>
    %cst = arith.constant dense<0.000000e+00> : vector<32x64xf32>
    %4 = tpu.matmul %3, %2, %cst {dimension_numbers = #tpu.dot_dimension_numbers<[1], [0], [0], [1], [0, 0, 1, 1], [], []>} : vector<32x32xbf16>, vector<32x64xbf16>, vector<32x64xf32> -> vector<32x64xf32>
    %c0_4 = arith.constant 0 : index
    %c0_5 = arith.constant 0 : index
    %5 = vector.load %arg5[%c0_4, %c0_5] : memref<32x128xbf16, #tpu.memory_space<vmem>>, vector<32x128xbf16>
    %c0_6 = arith.constant 0 : index
    %c0_7 = arith.constant 0 : index
    %c0_8 = arith.constant 0 : index
    %6 = vector.load %arg3[%c0_6, %c0_7, %c0_8] : memref<1x128x64xbf16, #tpu.memory_space<vmem>>, vector<1x128x64xbf16>
    %7 = vector.shape_cast %6 : vector<1x128x64xbf16> to vector<128x64xbf16>
    %cst_9 = arith.constant dense<0.000000e+00> : vector<32x64xf32>
    %8 = tpu.matmul %5, %7, %cst_9 {dimension_numbers = #tpu.dot_dimension_numbers<[1], [0], [0], [1], [0, 0, 1, 1], [], []>} : vector<32x128xbf16>, vector<128x64xbf16>, vector<32x64xf32> -> vector<32x64xf32>
    %9 = arith.addf %4, %8 : vector<32x64xf32>
    %cst_10 = arith.constant dense<0.000000e+00> : vector<64xf32>
    %10 = vector.multi_reduction <add>, %9, %cst_10 [0] : vector<32x64xf32> to vector<64xf32>
    %11 = vector.shape_cast %10 : vector<64xf32> to vector<1x64xf32>
    %cst_11 = arith.constant 3.200000e+01 : f32
    %12 = vector.broadcast %cst_11 : f32 to vector<1x64xf32>
    %13 = arith.divf %11, %12 : vector<1x64xf32>
    %14 = vector.broadcast %13 : vector<1x64xf32> to vector<32x64xf32>
    %15 = arith.subf %9, %14 : vector<32x64xf32>
    %16 = arith.mulf %15, %15 : vector<32x64xf32>
    %cst_12 = arith.constant dense<0.000000e+00> : vector<64xf32>
    %17 = vector.multi_reduction <add>, %16, %cst_12 [0] : vector<32x64xf32> to vector<64xf32>
    %18 = vector.shape_cast %17 : vector<64xf32> to vector<1x64xf32>
    %cst_13 = arith.constant 3.200000e+01 : f32
    %19 = vector.broadcast %cst_13 : f32 to vector<1x64xf32>
    %20 = arith.divf %18, %19 : vector<1x64xf32>
    %cst_14 = arith.constant 9.99999997E-7 : f32
    %21 = vector.broadcast %cst_14 : f32 to vector<1x64xf32>
    %22 = arith.addf %20, %21 : vector<1x64xf32>
    %23 = math.rsqrt %22 : vector<1x64xf32>
    %c0_15 = arith.constant 0 : index
    %c0_16 = arith.constant 0 : index
    %24 = vector.load %arg6[%c0_15, %c0_16] : memref<32x1xf32, #tpu.memory_space<vmem>>, vector<32x1xf32>
    %25 = vector.broadcast %24 : vector<32x1xf32> to vector<32x64xf32>
    %26 = vector.broadcast %23 : vector<1x64xf32> to vector<32x64xf32>
    %27 = arith.mulf %25, %26 : vector<32x64xf32>
    %28 = arith.mulf %15, %27 : vector<32x64xf32>
    %c0_17 = arith.constant 0 : index
    %c0_18 = arith.constant 0 : index
    %29 = vector.load %arg7[%c0_17, %c0_18] : memref<32x1xf32, #tpu.memory_space<vmem>>, vector<32x1xf32>
    %30 = vector.broadcast %29 : vector<32x1xf32> to vector<32x64xf32>
    %31 = arith.addf %28, %30 : vector<32x64xf32>
    %c0_19 = arith.constant 0 : index
    %c0_20 = arith.constant 0 : index
    %c0_21 = arith.constant 0 : index
    %32 = vector.load %arg8[%c0_19, %c0_20, %c0_21] : memref<1x32x64xf32, #tpu.memory_space<vmem>>, vector<1x32x64xf32>
    %33 = vector.shape_cast %32 : vector<1x32x64xf32> to vector<32x64xf32>
    %34 = vector.shape_cast %31 : vector<32x64xf32> to vector<1x32x64xf32>
    tpu.vector_store %arg8[%c0_19, %c0_20, %c0_21], %34 {strides = array<i32>} : memref<1x32x64xf32, #tpu.memory_space<vmem>>, vector<1x32x64xf32>,
    return
  }
  func.func @transform_0(%arg0: i32, %arg1: i32) -> (i32, i32, i32) {
    %c0_i32 = arith.constant 0 : i32
    %c0_i32_0 = arith.constant 0 : i32
    return %arg0, %c0_i32, %arg1 : i32, i32, i32
  }
  func.func @transform_1(%arg0: i32, %arg1: i32) -> (i32, i32, i32) {
    %c0_i32 = arith.constant 0 : i32
    %c0_i32_0 = arith.constant 0 : i32
    return %arg0, %c0_i32, %arg1 : i32, i32, i32
  }
  func.func @transform_2(%arg0: i32, %arg1: i32) -> (i32, i32) {
    %c0_i32 = arith.constant 0 : i32
    %c0_i32_0 = arith.constant 0 : i32
    %c0_i32_1 = arith.constant 0 : i32
    return %c0_i32, %c0_i32_0 : i32, i32
  }
  func.func @transform_3(%arg0: i32, %arg1: i32) -> (i32, i32) {
    %c0_i32 = arith.constant 0 : i32
    %c0_i32_0 = arith.constant 0 : i32
    %c0_i32_1 = arith.constant 0 : i32
    return %c0_i32, %c0_i32_0 : i32, i32
  }
  func.func @transform_4(%arg0: i32, %arg1: i32) -> (i32, i32) {
    %c0_i32 = arith.constant 0 : i32
    %c0_i32_0 = arith.constant 0 : i32
    %c0_i32_1 = arith.constant 0 : i32
    return %c0_i32, %c0_i32_0 : i32, i32
  }
  func.func @transform_5(%arg0: i32, %arg1: i32) -> (i32, i32) {
    %c0_i32 = arith.constant 0 : i32
    %c0_i32_0 = arith.constant 0 : i32
    %c0_i32_1 = arith.constant 0 : i32
    return %c0_i32, %c0_i32_0 : i32, i32
  }
  func.func @transform_6(%arg0: i32, %arg1: i32) -> (i32, i32, i32) {
    %c0_i32 = arith.constant 0 : i32
    %c0_i32_0 = arith.constant 0 : i32
    return %arg0, %c0_i32, %arg1 : i32, i32, i32
  }
}

module attributes {stable_mosaic.version = 11 : i64} {
  func.func @_camera_enc_kernel(%arg0: i32, %arg1: i32, %arg2: memref<1x32x64xf32, #tpu.memory_space<vmem>>, %arg3: memref<1x128x64xbf16, #tpu.memory_space<vmem>>, %arg4: memref<32x32xbf16, #tpu.memory_space<vmem>>, %arg5: memref<32x128xbf16, #tpu.memory_space<vmem>>, %arg6: memref<32x1xf32, #tpu.memory_space<vmem>>, %arg7: memref<32x1xf32, #tpu.memory_space<vmem>>, %arg8: memref<1x32x64xf32, #tpu.memory_space<vmem>>) attributes {dimension_semantics = [#tpu.dimension_semantics<parallel>, #tpu.dimension_semantics<parallel>], iteration_bounds = array<i64: 2, 1>, scalar_prefetch = 0 : i64, scratch_operands = 0 : i64, tpu.core_type = #tpu.core_type<tc>, window_params = [{transform_indices = @transform_0, window_bounds = array<i64: 1, 32, 64>}, {transform_indices = @transform_1, window_bounds = array<i64: 1, 128, 64>}, {pipeline_mode = #tpu.pipeline_mode<synchronous>, transform_indices = @transform_2, window_bounds = array<i64: 32, 32>}, {pipeline_mode = #tpu.pipeline_mode<synchronous>, transform_indices = @transform_3, window_bounds = array<i64: 32, 128>}, {pipeline_mode = #tpu.pipeline_mode<synchronous>, transform_indices = @transform_4, window_bounds = array<i64: 32, 1>}, {pipeline_mode = #tpu.pipeline_mode<synchronous>, transform_indices = @transform_5, window_bounds = array<i64: 32, 1>}, {transform_indices = @transform_6, window_bounds = array<i64: 1, 32, 64>}]} {
    %c0 = arith.constant 0 : index
    %c0_0 = arith.constant 0 : index
    %c0_1 = arith.constant 0 : index
    %0 = vector.load %arg2[%c0, %c0_0, %c0_1] : memref<1x32x64xf32, #tpu.memory_space<vmem>>, vector<1x32x64xf32>
    %1 = vector.shape_cast %0 : vector<1x32x64xf32> to vector<32x64xf32>
    %2 = arith.truncf %1 : vector<32x64xf32> to vector<32x64xbf16>
    %c0_2 = arith.constant 0 : index
    %c0_3 = arith.constant 0 : index
    %3 = vector.load %arg4[%c0_2, %c0_3] : memref<32x32xbf16, #tpu.memory_space<vmem>>, vector<32x32xbf16>
    %cst = arith.constant dense<0.000000e+00> : vector<32x64xf32>
    %4 = tpu.matmul %3, %2, %cst {dimension_numbers = #tpu.dot_dimension_numbers<[1], [0], [0], [1], [0, 0, 1, 1], [], []>} : vector<32x32xbf16>, vector<32x64xbf16>, vector<32x64xf32> -> vector<32x64xf32>
    %c0_4 = arith.constant 0 : index
    %c0_5 = arith.constant 0 : index
    %5 = vector.load %arg5[%c0_4, %c0_5] : memref<32x128xbf16, #tpu.memory_space<vmem>>, vector<32x128xbf16>
    %c0_6 = arith.constant 0 : index
    %c0_7 = arith.constant 0 : index
    %c0_8 = arith.constant 0 : index
    %6 = vector.load %arg3[%c0_6, %c0_7, %c0_8] : memref<1x128x64xbf16, #tpu.memory_space<vmem>>, vector<1x128x64xbf16>
    %7 = vector.shape_cast %6 : vector<1x128x64xbf16> to vector<128x64xbf16>
    %cst_9 = arith.constant dense<0.000000e+00> : vector<32x64xf32>
    %8 = tpu.matmul %5, %7, %cst_9 {dimension_numbers = #tpu.dot_dimension_numbers<[1], [0], [0], [1], [0, 0, 1, 1], [], []>} : vector<32x128xbf16>, vector<128x64xbf16>, vector<32x64xf32> -> vector<32x64xf32>
    %9 = arith.addf %4, %8 : vector<32x64xf32>
    %cst_10 = arith.constant dense<0.000000e+00> : vector<64xf32>
    %10 = vector.multi_reduction <add>, %9, %cst_10 [0] : vector<32x64xf32> to vector<64xf32>
    %11 = vector.shape_cast %10 : vector<64xf32> to vector<1x64xf32>
    %cst_11 = arith.constant 3.200000e+01 : f32
    %12 = vector.broadcast %cst_11 : f32 to vector<1x64xf32>
    %13 = arith.divf %11, %12 : vector<1x64xf32>
    %14 = vector.broadcast %13 : vector<1x64xf32> to vector<32x64xf32>
    %15 = arith.subf %9, %14 : vector<32x64xf32>
    %16 = arith.mulf %15, %15 : vector<32x64xf32>
    %cst_12 = arith.constant dense<0.000000e+00> : vector<64xf32>
    %17 = vector.multi_reduction <add>, %16, %cst_12 [0] : vector<32x64xf32> to vector<64xf32>
    %18 = vector.shape_cast %17 : vector<64xf32> to vector<1x64xf32>
    %cst_13 = arith.constant 3.200000e+01 : f32
    %19 = vector.broadcast %cst_13 : f32 to vector<1x64xf32>
    %20 = arith.divf %18, %19 : vector<1x64xf32>
    %cst_14 = arith.constant 9.99999997E-7 : f32
    %21 = vector.broadcast %cst_14 : f32 to vector<1x64xf32>
    %22 = arith.addf %20, %21 : vector<1x64xf32>
    %23 = math.rsqrt %22 : vector<1x64xf32>
    %c0_15 = arith.constant 0 : index
    %c0_16 = arith.constant 0 : index
    %24 = vector.load %arg6[%c0_15, %c0_16] : memref<32x1xf32, #tpu.memory_space<vmem>>, vector<32x1xf32>
    %25 = vector.broadcast %24 : vector<32x1xf32> to vector<32x64xf32>
    %26 = vector.broadcast %23 : vector<1x64xf32> to vector<32x64xf32>
    %27 = arith.mulf %25, %26 : vector<32x64xf32>
    %28 = arith.mulf %15, %27 : vector<32x64xf32>
    %c0_17 = arith.constant 0 : index
    %c0_18 = arith.constant 0 : index
    %29 = vector.load %arg7[%c0_17, %c0_18] : memref<32x1xf32, #tpu.memory_space<vmem>>, vector<32x1xf32>
    %30 = vector.broadcast %29 : vector<32x1xf32> to vector<32x64xf32>
    %31 = arith.addf %28, %30 : vector<32x64xf32>
    %c0_19 = arith.constant 0 : index
    %c0_20 = arith.constant 0 : index
    %c0_21 = arith.constant 0 : index
    %32 = vector.load %arg8[%c0_19, %c0_20, %c0_21] : memref<1x32x64xf32, #tpu.memory_space<vmem>>, vector<1x32x64xf32>
    %33 = vector.shape_cast %32 : vector<1x32x64xf32> to vector<32x64xf32>
    %34 = vector.shape_cast %31 : vector<32x64xf32> to vector<1x32x64xf32>
    tpu.vector_store %arg8[%c0_19, %c0_20, %c0_21], %34 {strides = array<i32>} : memref<1x32x64xf32, #tpu.memory_space<vmem>>, vector<1x32x64xf32>,
    return
  }
  func.func @transform_0(%arg0: i32, %arg1: i32) -> (i32, i32, i32) {
    %c0_i32 = arith.constant 0 : i32
    %c0_i32_0 = arith.constant 0 : i32
    return %arg0, %c0_i32, %arg1 : i32, i32, i32
  }
  func.func @transform_1(%arg0: i32, %arg1: i32) -> (i32, i32, i32) {
    %c0_i32 = arith.constant 0 : i32
    %c0_i32_0 = arith.constant 0 : i32
    return %arg0, %c0_i32, %arg1 : i32, i32, i32
  }
  func.func @transform_2(%arg0: i32, %arg1: i32) -> (i32, i32) {
    %c0_i32 = arith.constant 0 : i32
    %c0_i32_0 = arith.constant 0 : i32
    %c0_i32_1 = arith.constant 0 : i32
    return %c0_i32, %c0_i32_0 : i32, i32
  }
  func.func @transform_3(%arg0: i32, %arg1: i32) -> (i32, i32) {
    %c0_i32 = arith.constant 0 : i32
    %c0_i32_0 = arith.constant 0 : i32
    %c0_i32_1 = arith.constant 0 : i32
    return %c0_i32, %c0_i32_0 : i32, i32
  }
  func.func @transform_4(%arg0: i32, %arg1: i32) -> (i32, i32) {
    %c0_i32 = arith.constant 0 : i32
    %c0_i32_0 = arith.constant 0 : i32
    %c0_i32_1 = arith.constant 0 : i32
    return %c0_i32, %c0_i32_0 : i32, i32
  }
  func.func @transform_5(%arg0: i32, %arg1: i32) -> (i32, i32) {
    %c0_i32 = arith.constant 0 : i32
    %c0_i32_0 = arith.constant 0 : i32
    %c0_i32_1 = arith.constant 0 : i32
    return %c0_i32, %c0_i32_0 : i32, i32
  }
  func.func @transform_6(%arg0: i32, %arg1: i32) -> (i32, i32, i32) {
    %c0_i32 = arith.constant 0 : i32
    %c0_i32_0 = arith.constant 0 : i32
    return %arg0, %c0_i32, %arg1 : i32, i32, i32
  }
}

</mosaic_0001>

<llo_original>
// kernel: tpu_custom_call.1
$region0: #{tpu_custom_call.1}
  #allocation0 [shape = 'u32[]', space=smem, size = 0x4, offset = 0x4, fixed_abs, tag = 'smem constant byte address 0x4 - core index']
  #allocation1 [shape = 'u32[144,128]{1,0:T(1,128)}', space=vmem, size = 0x12000, scoped, tag = 'internal scratch']
  %s0 = inlined_call_operand.vmem [shape: f32[2,32,64], index: 0, kind: input, shape index: {}]
  %s1 = inlined_call_operand.vmem [shape: bf16[2,128,64], index: 1, kind: input, shape index: {}]
  %s2 = inlined_call_operand.vmem [shape: bf16[32,32], index: 2, kind: input, shape index: {}]
  %s3 = inlined_call_operand.vmem [shape: bf16[32,128], index: 3, kind: input, shape index: {}]
  %s4 = inlined_call_operand.vmem [shape: f32[32,1], index: 4, kind: input, shape index: {}]
  %s5 = inlined_call_operand.vmem [shape: f32[32,1], index: 5, kind: input, shape index: {}]
  %s6 = inlined_call_operand.hbm [shape: f32[2,32,64], index: 6, kind: output, shape index: {}]
  %s7 = sld [smem:[#allocation0]]
  $region57: #{tpu_custom_call.1} parent=0
    _
  %s9 = ssub.s32 1, %s7
  %s10 = scalar_select 0, %s9, %s7
  $region1: #{tpu_custom_call.1} parent=0
    #allocation2 [shape = 'u8[32768]{0}', space=vmem, size = 0x8000, scoped, tag = 'output window, operand 0']
    #allocation3 [shape = 's32[2]{0}', space=sflag, size = 0x8, scoped, tag = 'scoped memory for tpu_custom_call.1']
    %11 = vsyncpa [#allocation3], 0
    %s12 = scalar_lea.sflag [#allocation3], 1
    %13 = vsyncpa %s12, 0
    loop: start=0, step=1, limit=4
    $region2: #{tpu_custom_call.1} parent=1 // loop_pre_header
      _
    $region3: #{tpu_custom_call.1} parent=1 // loop_header
      %s15 = sphi 0, %s19
      %p16 = scmp.ge.s32.totalorder %s15, 4
      %s22 = sphi 0, %s34
      %s23 = sphi 0, %s30
      %s24 = sphi 0, %s22
      %s25 = sphi 0, %s23
      %s26 = sphi 0, %s24
      %s27 = sphi 0, %s25
      %s39 = sphi 0, %s41
      %s42 = sphi 0, %s39
      %s43 = sphi 0, %s42
      %s59 = sphi 0, %s43
      %s67 = sphi 0, %s69
      %s70 = sphi 0, %s67
      %s71 = sphi 0, %s70
      %s87 = sphi 0, %s71
      %s91 = sphi 0, %s91
      %s93 = sphi 0, %s91
      %s94 = sphi 0, %s93
      %s108 = sphi 0, %s94
      %s112 = sphi 0, %s112
      %s114 = sphi 0, %s112
      %s115 = sphi 0, %s114
      %s129 = sphi 0, %s115
      %s133 = sphi 0, %s133
      %s135 = sphi 0, %s133
      %s136 = sphi 0, %s135
      %s150 = sphi 0, %s136
      %s154 = sphi 0, %s154
      %s156 = sphi 0, %s154
      %s157 = sphi 0, %s156
      %s171 = sphi 0, %s157
      %s179 = sphi 0, %s181
      %s182 = sphi 0, %s179
      %s183 = sphi 0, %s182
      %s199 = sphi 0, %s183
    $region4: #{tpu_custom_call.1} parent=1 // loop_header_branch
      %18 = sbr.rel (%p16) target = $region8
    $region5: #{tpu_custom_call.1} parent=1 // loop_body
      %s20 = ssub.s32 %s15, 1
      %s21 = ssub.s32 %s15, 2
      %s28 = sadd.s32 1, %s23
      %p29 = scmp.ge.s32.totalorder %s28, 1
      %s30 = scalar_select %p29, 0, %s28
      %s31 = sadd.s32 1, %s22
      %s32 = scalar_select %p29, %s31, %s22
      %p33 = scmp.ge.s32.totalorder %s32, 2
      %s34 = scalar_select %p33, 0, %s32
      %s35 = ssub.s32 %s22, %s34
      %s36 = ssub.s32 %s23, %s30
      %s37 = sor.u32 %s35, %s36
      %p38 = scmp.eq.s32.totalorder %s37, 0
      %s40 = sadd.s32 %s39, 1
      %s41 = scalar_select %p38, %s39, %s40
      %p44 = pneg %p38
      %p45 = scmp.eq.s32.totalorder %s15, 1
      %p46 = por %p44, %p45
      %p47 = scmp.ne.s32.totalorder %s39, %s42
      %p48 = scmp.eq.s32.totalorder %s15, 0
      %p49 = por %p47, %p48
      %p50 = scmp.ne.s32.totalorder %s39, %s42
      %p51 = scmp.eq.s32.totalorder %s20, 1
      %p52 = por %p50, %p51
      %p53 = scmp.ne.s32.totalorder %s42, %s43
      %p54 = scmp.eq.s32.totalorder %s20, 0
      %p55 = por %p53, %p54
      %p56 = scmp.ne.s32.totalorder %s42, %s43
      %p57 = scmp.eq.s32.totalorder %s21, 1
      %p58 = por %p56, %p57
      %p60 = scmp.ne.s32.totalorder %s43, %s59
      %p61 = scmp.eq.s32.totalorder %s21, 0
      %p62 = por %p60, %p61
      %s63 = ssub.s32 %s22, %s34
      %s64 = ssub.s32 %s23, %s30
      %s65 = sor.u32 %s63, %s64
      %p66 = scmp.eq.s32.totalorder %s65, 0
      %s68 = sadd.s32 %s67, 1
      %s69 = scalar_select %p66, %s67, %s68
      %p72 = pneg %p66
      %p73 = scmp.eq.s32.totalorder %s15, 1
      %p74 = por %p72, %p73
      %p75 = scmp.ne.s32.totalorder %s67, %s70
      %p76 = scmp.eq.s32.totalorder %s15, 0
      %p77 = por %p75, %p76
      %p78 = scmp.ne.s32.totalorder %s67, %s70
      %p79 = scmp.eq.s32.totalorder %s20, 1
      %p80 = por %p78, %p79
      %p81 = scmp.ne.s32.totalorder %s70, %s71
      %p82 = scmp.eq.s32.totalorder %s20, 0
      %p83 = por %p81, %p82
      %p84 = scmp.ne.s32.totalorder %s70, %s71
      %p85 = scmp.eq.s32.totalorder %s21, 1
      %p86 = por %p84, %p85
      %p88 = scmp.ne.s32.totalorder %s71, %s87
      %p89 = scmp.eq.s32.totalorder %s21, 0
      %p90 = por %p88, %p89
      %s92 = sadd.s32 %s91, 1
      %p95 = scmp.eq.s32.totalorder %s15, 1
      %p96 = scmp.ne.s32.totalorder %s91, %s93
      %p97 = scmp.eq.s32.totalorder %s15, 0
      %p98 = por %p96, %p97
      %p99 = scmp.ne.s32.totalorder %s91, %s93
      %p100 = scmp.eq.s32.totalorder %s20, 1
      %p101 = por %p99, %p100
      %p102 = scmp.ne.s32.totalorder %s93, %s94
      %p103 = scmp.eq.s32.totalorder %s20, 0
      %p104 = por %p102, %p103
      %p105 = scmp.ne.s32.totalorder %s93, %s94
      %p106 = scmp.eq.s32.totalorder %s21, 1
      %p107 = por %p105, %p106
      %p109 = scmp.ne.s32.totalorder %s94, %s108
      %p110 = scmp.eq.s32.totalorder %s21, 0
      %p111 = por %p109, %p110
      %s113 = sadd.s32 %s112, 1
      %p116 = scmp.eq.s32.totalorder %s15, 1
      %p117 = scmp.ne.s32.totalorder %s112, %s114
      %p118 = scmp.eq.s32.totalorder %s15, 0
      %p119 = por %p117, %p118
      %p120 = scmp.ne.s32.totalorder %s112, %s114
      %p121 = scmp.eq.s32.totalorder %s20, 1
      %p122 = por %p120, %p121
      %p123 = scmp.ne.s32.totalorder %s114, %s115
      %p124 = scmp.eq.s32.totalorder %s20, 0
      %p125 = por %p123, %p124
      %p126 = scmp.ne.s32.totalorder %s114, %s115
      %p127 = scmp.eq.s32.totalorder %s21, 1
      %p128 = por %p126, %p127
      %p130 = scmp.ne.s32.totalorder %s115, %s129
      %p131 = scmp.eq.s32.totalorder %s21, 0
      %p132 = por %p130, %p131
      %s134 = sadd.s32 %s133, 1
      %p137 = scmp.eq.s32.totalorder %s15, 1
      %p138 = scmp.ne.s32.totalorder %s133, %s135
      %p139 = scmp.eq.s32.totalorder %s15, 0
      %p140 = por %p138, %p139
      %p141 = scmp.ne.s32.totalorder %s133, %s135
      %p142 = scmp.eq.s32.totalorder %s20, 1
      %p143 = por %p141, %p142
      %p144 = scmp.ne.s32.totalorder %s135, %s136
      %p145 = scmp.eq.s32.totalorder %s20, 0
      %p146 = por %p144, %p145
      %p147 = scmp.ne.s32.totalorder %s135, %s136
      %p148 = scmp.eq.s32.totalorder %s21, 1
      %p149 = por %p147, %p148
      %p151 = scmp.ne.s32.totalorder %s136, %s150
      %p152 = scmp.eq.s32.totalorder %s21, 0
      %p153 = por %p151, %p152
      %s155 = sadd.s32 %s154, 1
      %p158 = scmp.eq.s32.totalorder %s15, 1
      %p159 = scmp.ne.s32.totalorder %s154, %s156
      %p160 = scmp.eq.s32.totalorder %s15, 0
      %p161 = por %p159, %p160
      %p162 = scmp.ne.s32.totalorder %s154, %s156
      %p163 = scmp.eq.s32.totalorder %s20, 1
      %p164 = por %p162, %p163
      %p165 = scmp.ne.s32.totalorder %s156, %s157
      %p166 = scmp.eq.s32.totalorder %s20, 0
      %p167 = por %p165, %p166
      %p168 = scmp.ne.s32.totalorder %s156, %s157
      %p169 = scmp.eq.s32.totalorder %s21, 1
      %p170 = por %p168, %p169
      %p172 = scmp.ne.s32.totalorder %s157, %s171
      %p173 = scmp.eq.s32.totalorder %s21, 0
      %p174 = por %p172, %p173
      %s175 = ssub.s32 %s22, %s34
      %s176 = ssub.s32 %s23, %s30
      %s177 = sor.u32 %s175, %s176
      %p178 = scmp.eq.s32.totalorder %s177, 0
      %s180 = sadd.s32 %s179, 1
      %s181 = scalar_select %p178, %s179, %s180
      %p184 = pneg %p178
      %p185 = scmp.eq.s32.totalorder %s15, 1
      %p186 = por %p184, %p185
      %p187 = scmp.ne.s32.totalorder %s179, %s182
      %p188 = scmp.eq.s32.totalorder %s15, 0
      %p189 = por %p187, %p188
      %p190 = scmp.ne.s32.totalorder %s179, %s182
      %p191 = scmp.eq.s32.totalorder %s20, 1
      %p192 = por %p190, %p191
      %p193 = scmp.ne.s32.totalorder %s182, %s183
      %p194 = scmp.eq.s32.totalorder %s20, 0
      %p195 = por %p193, %p194
      %p196 = scmp.ne.s32.totalorder %s182, %s183
      %p197 = scmp.eq.s32.totalorder %s21, 1
      %p198 = por %p196, %p197
      %p200 = scmp.ne.s32.totalorder %s183, %s199
      %p201 = scmp.eq.s32.totalorder %s21, 0
      %p202 = por %p200, %p201
      %p203 = scmp.le.s32.totalorder 1, %s15
      %p204 = scmp.lt.s32.totalorder %s15, 3
      %p205 = pnand %p203, %p204
      %p206 = pneg %p205
      // Predicated region
      $region9: #{tpu_custom_call.1} parent=5 // pred_check
        _
      $region10: #{tpu_custom_call.1} parent=5 // pred_check_branch
        %208 = sbr.rel (%p205) target = $region12
      $region11: #{tpu_custom_call.1} parent=5 // pred_region
        %s209 = ssub.s32 %s15, 1
        // Predicated region
        $region13: #{tpu_custom_call.1} parent=11 // pred_check
          %p210 = pneg %p104
        $region14: #{tpu_custom_call.1} parent=11 // pred_check_branch
          %212 = sbr.rel (%p210) target = $region16
        $region15: #{tpu_custom_call.1} parent=11 // pred_region
          _
        $region16: #{tpu_custom_call.1} parent=11 // pred_fallthru
          _
        // Predicated region
        $region17: #{tpu_custom_call.1} parent=11 // pred_check
          %p213 = pneg %p125
        $region18: #{tpu_custom_call.1} parent=11 // pred_check_branch
          %215 = sbr.rel (%p213) target = $region20
        $region19: #{tpu_custom_call.1} parent=11 // pred_region
          _
        $region20: #{tpu_custom_call.1} parent=11 // pred_fallthru
          _
        // Predicated region
        $region21: #{tpu_custom_call.1} parent=11 // pred_check
          %p216 = pneg %p146
        $region22: #{tpu_custom_call.1} parent=11 // pred_check_branch
          %218 = sbr.rel (%p216) target = $region24
        $region23: #{tpu_custom_call.1} parent=11 // pred_region
          _
        $region24: #{tpu_custom_call.1} parent=11 // pred_fallthru
          _
        // Predicated region
        $region25: #{tpu_custom_call.1} parent=11 // pred_check
          %p219 = pneg %p167
        $region26: #{tpu_custom_call.1} parent=11 // pred_check_branch
          %221 = sbr.rel (%p219) target = $region28
        $region27: #{tpu_custom_call.1} parent=11 // pred_region
          _
        $region28: #{tpu_custom_call.1} parent=11 // pred_fallthru
          _
      $region12: #{tpu_custom_call.1} parent=5 // pred_fallthru
        _
      %p222 = scmp.lt.s32.totalorder %s15, 2
      // Predicated region
      $region29: #{tpu_custom_call.1} parent=5 // pred_check
        %p223 = pneg %p222
      $region30: #{tpu_custom_call.1} parent=5 // pred_check_branch
        %225 = sbr.rel (%p223) target = $region32
      $region31: #{tpu_custom_call.1} parent=5 // pred_region
        // Predicated region
        $region33: #{tpu_custom_call.1} parent=31 // pred_check
          %p226 = pneg %p49
        $region34: #{tpu_custom_call.1} parent=31 // pred_check_branch
          %228 = sbr.rel (%p226) target = $region36
        $region35: #{tpu_custom_call.1} parent=31 // pred_region
          %p229 = scmp.lt.s32.totalorder %s22, 1
          %s230 = scalar_select %p229, %s22, 1
          %p231 = scmp.lt.s32.totalorder %s23, 0
          %s232 = scalar_select %p231, %s23, 0
          %s233 = smul.addr %s230, 4
          %s234 = sadd.s32 %s232, %s233
          %s235 = smul.addr %s234, 8
          %s236 = scalar_lea.vmem %s0, %s235
        $region36: #{tpu_custom_call.1} parent=31 // pred_fallthru
          _
        // Predicated region
        $region37: #{tpu_custom_call.1} parent=31 // pred_check
          %p237 = pneg %p77
        $region38: #{tpu_custom_call.1} parent=31 // pred_check_branch
          %239 = sbr.rel (%p237) target = $region40
        $region39: #{tpu_custom_call.1} parent=31 // pred_region
          %p240 = scmp.lt.s32.totalorder %s22, 1
          %s241 = scalar_select %p240, %s22, 1
          %p242 = scmp.lt.s32.totalorder %s23, 0
          %s243 = scalar_select %p242, %s23, 0
          %s244 = smul.addr %s241, 16
          %s245 = sadd.s32 %s243, %s244
          %s246 = smul.addr %s245, 4
          %s247 = scalar_lea.vmem %s1, %s246
        $region40: #{tpu_custom_call.1} parent=31 // pred_fallthru
          _
      $region32: #{tpu_custom_call.1} parent=5 // pred_fallthru
        _
      %p248 = scmp.le.s32.totalorder 1, %s15
      %p249 = scmp.lt.s32.totalorder %s15, 3
      %p250 = pnand %p248, %p249
      %p251 = pneg %p250
      // Predicated region
      $region41: #{tpu_custom_call.1} parent=5 // pred_check
        _
      $region42: #{tpu_custom_call.1} parent=5 // pred_check_branch
        %253 = sbr.rel (%p250) target = $region44
      $region43: #{tpu_custom_call.1} parent=5 // pred_region
        %s254 = ssub.s32 %s15, 1
        %p255 = scmp.lt.s32.totalorder %s24, 1
        %s256 = scalar_select %p255, %s24, 1
        %p257 = scmp.lt.s32.totalorder %s25, 0
        %s258 = scalar_select %p257, %s25, 0
        %s259 = smul.addr %s256, 4
        %s260 = sadd.s32 %s258, %s259
        %s261 = smul.addr %s260, 8
        %s262 = scalar_lea.vmem %s0, %s261
        %p263 = pneg %p55
        %p264 = pneg %p52
        %p265 = scmp.lt.s32.totalorder %s24, 1
        %s266 = scalar_select %p265, %s24, 1
        %p267 = scmp.lt.s32.totalorder %s25, 0
        %s268 = scalar_select %p267, %s25, 0
        %s269 = smul.addr %s266, 16
        %s270 = sadd.s32 %s268, %s269
        %s271 = smul.addr %s270, 4
        %s272 = scalar_lea.vmem %s1, %s271
        %p273 = pneg %p83
        %p274 = pneg %p80
        %p275 = pneg %p104
        %p276 = pneg %p101
        %p277 = pneg %p125
        %p278 = pneg %p122
        %p279 = pneg %p146
        %p280 = pneg %p143
        %p281 = pneg %p167
        %p282 = pneg %p164
        %p283 = pneg %p195
        %p284 = pneg %p192
        %s285 = sand.u32 %s182, 1
        %s286 = scalar_lea.sflag [#allocation3], %s285
        %s287 = sand.u32 %s182, 1
        %s288 = smul.addr %s287, 32
        %s289 = scalar_lea.vmem [#allocation2], %s288
        %p290 = scmp.lt.s32.totalorder %s24, 1
        %s291 = scalar_select %p290, %s24, 1
        %p292 = scmp.lt.s32.totalorder %s25, 0
        %s293 = scalar_select %p292, %s25, 0
        %s294 = smul.addr %s291, 4
        %s295 = sadd.s32 %s293, %s294
        %s296 = smul.addr %s295, 8
        %s297 = scalar_lea.vmem %s0, %s296
        %p298 = scmp.lt.s32.totalorder %s24, 1
        %s299 = scalar_select %p298, %s24, 1
        %p300 = scmp.lt.s32.totalorder %s25, 0
        %s301 = scalar_select %p300, %s25, 0
        %s302 = smul.addr %s299, 16
        %s303 = sadd.s32 %s301, %s302
        %s304 = smul.addr %s303, 4
        %s305 = scalar_lea.vmem %s1, %s304
        %v307 = vld [vmem:[%s297] sm:$0xff]
        %v308 = vld [vmem:[%s297 + $0x8] sm:$0xff]
        %v309 = vld [vmem:[%s297 + $0x10] sm:$0xff]
        %v310 = vld [vmem:[%s297 + $0x18] sm:$0xff]
        %v311 = vpack.c.bf16 %v308, %v307
        %v312 = vpack.c.bf16 %v310, %v309
        %v313 = vld [vmem:[%s2] sm:$0xf]
        %v314 = vld [vmem:[%s2 + $0x4] sm:$0xf]
        %v315 = vld [vmem:[%s2 + $0x8] sm:$0xf]
        %v316 = vld [vmem:[%s2 + $0xc] sm:$0xf]
        %v317 = vld [vmem:[%s3] sm:$0xf]
        %v318 = vld [vmem:[%s3 + $0x4] sm:$0xf]
        %v319 = vld [vmem:[%s3 + $0x8] sm:$0xf]
        %v320 = vld [vmem:[%s3 + $0xc] sm:$0xf]
        %v321 = vld [vmem:[%s305] sm:$0xf]
        %v322 = vld [vmem:[%s305 + $0x4] sm:$0xf]
        %v323 = vld [vmem:[%s305 + $0x8] sm:$0xf]
        %v324 = vld [vmem:[%s305 + $0xc] sm:$0xf]
        %v325 = vld [vmem:[%s305 + $0x10] sm:$0xf]
        %v326 = vld [vmem:[%s305 + $0x14] sm:$0xf]
        %v327 = vld [vmem:[%s305 + $0x18] sm:$0xf]
        %v328 = vld [vmem:[%s305 + $0x1c] sm:$0xf]
        %v329 = vld [vmem:[%s305 + $0x20] sm:$0xf]
        %v330 = vld [vmem:[%s305 + $0x24] sm:$0xf]
        %v331 = vld [vmem:[%s305 + $0x28] sm:$0xf]
        %v332 = vld [vmem:[%s305 + $0x2c] sm:$0xf]
        %v333 = vld [vmem:[%s305 + $0x30] sm:$0xf]
        %v334 = vld [vmem:[%s305 + $0x34] sm:$0xf]
        %v335 = vld [vmem:[%s305 + $0x38] sm:$0xf]
        %v336 = vld [vmem:[%s305 + $0x3c] sm:$0xf]
        %v341 = vunpack.c.l.b16 %v317
        %v342 = vunpack.c.l.b16 %v318
        %v343 = vunpack.c.l.b16 %v319
        %v344 = vunpack.c.l.b16 %v320
        %v345 = vpack.c.b16 %v342, %v341
        %v346 = vpack.c.b16 %v344, %v343
        %v365 = vunpack.c.l.b16 %v321
        %v366 = vunpack.c.l.b16 %v322
        %v367 = vunpack.c.l.b16 %v323
        %v368 = vunpack.c.l.b16 %v324
        %v369 = vunpack.c.l.b16 %v325
        %v370 = vunpack.c.l.b16 %v326
        %v371 = vunpack.c.l.b16 %v327
        %v372 = vunpack.c.l.b16 %v328
        %v373 = vunpack.c.l.b16 %v329
        %v374 = vunpack.c.l.b16 %v330
        %v375 = vunpack.c.l.b16 %v331
        %v376 = vunpack.c.l.b16 %v332
        %v377 = vunpack.c.l.b16 %v333
        %v378 = vunpack.c.l.b16 %v334
        %v379 = vunpack.c.l.b16 %v335
        %v380 = vunpack.c.l.b16 %v336
        %v381 = vpack.c.b16 %v366, %v365
        %v382 = vpack.c.b16 %v368, %v367
        %v383 = vpack.c.b16 %v370, %v369
        %v384 = vpack.c.b16 %v372, %v371
        %v385 = vpack.c.b16 %v374, %v373
        %v386 = vpack.c.b16 %v376, %v375
        %v387 = vpack.c.b16 %v378, %v377
        %v388 = vpack.c.b16 %v380, %v379
        %397 = vmatprep.subr.bf16.mxu0 0
        %398 = vmatpush1.bf16.msra.mxu0 %v381
        %399 = vmatprep.subr.bf16.mxu0 0
        %400 = vmatpush1.bf16.msra.mxu0 %v382
        %401 = vmatprep.subr.bf16.mxu0 0
        %402 = vmatpush1.bf16.msra.mxu0 %v383
        %403 = vmatprep.subr.bf16.mxu0 0
        %404 = vmatpush1.bf16.msra.mxu0 %v384
        %405 = vmatprep.subr.bf16.mxu0 0
        %406 = vmatpush1.bf16.msra.mxu0 %v385
        %407 = vmatprep.subr.bf16.mxu0 0
        %408 = vmatpush1.bf16.msra.mxu0 %v386
        %409 = vmatprep.subr.bf16.mxu0 0
        %410 = vmatpush1.bf16.msra.mxu0 %v387
        %411 = vmatprep.subr.bf16.mxu0 0
        %412 = vmatpush1.bf16.msra.mxu0 %v388
        %413 = vmatprep.subr.bf16.mxu0 0
        %414 = vmatpush1.bf16.msra.mxu0 0
        %415 = vmatprep.subr.bf16.mxu0 0
        %416 = vmatpush1.bf16.msra.mxu0 0
        %417 = vmatprep.subr.bf16.mxu0 0
        %418 = vmatpush1.bf16.msra.mxu0 0
        %419 = vmatprep.subr.bf16.mxu0 0
        %420 = vmatpush1.bf16.msra.mxu0 0
        %421 = vmatprep.subr.bf16.mxu0 0
        %422 = vmatpush1.bf16.msra.mxu0 0
        %423 = vmatprep.subr.bf16.mxu0 0
        %424 = vmatpush1.bf16.msra.mxu0 0
        %425 = vmatprep.subr.bf16.mxu0 0
        %426 = vmatpush1.bf16.msra.mxu0 0
        %427 = vmatprep.subr.bf16.mxu0 0
        %428 = vmatpush1.bf16.msra.mxu0 0
        %429 = vmatprep.mubr.bf16.mxu0 0
        %430 = vmatmul.mubr.bf16.gmra.mrb[0].mxu0 %v345
        %v431 = vpop.f32.mrb[0].mxu0
        %v432 = vadd.f32 0.0, %v431
        %v433 = vpop.f32.mrb[0].mxu0
        %v434 = vpop.f32.mrb[0].mxu0
        %v435 = vadd.f32 0.0, %v434
        %v436 = vpop.f32.mrb[0].mxu0
        %437 = vmatprep.mubr.bf16.mxu0 0
        %438 = vmatmul.mubr.bf16.gmra.mrb[0].mxu0 %v346
        %v439 = vpop.f32.mrb[0].mxu0
        %v440 = vadd.f32 0.0, %v439
        %v441 = vpop.f32.mrb[0].mxu0
        %v442 = vpop.f32.mrb[0].mxu0
        %v443 = vadd.f32 0.0, %v442
        %v444 = vpop.f32.mrb[0].mxu0
        %445 = vdwg.mxu0
        %v450 = vunpack.c.l.b16 %v313
        %v451 = vunpack.c.l.b16 %v314
        %v452 = vunpack.c.l.b16 %v315
        %v453 = vunpack.c.l.b16 %v316
        %v454 = vpack.c.b16 %v451, %v450
        %v455 = vpack.c.b16 %v453, %v452
        %vm456 = vcmask 261120
        %v458 = vsel %vm456, %v454, 0
        %v461 = vsel %vm456, %v455, 0
        %463 = vmatprep.subr.bf16.mxu0 0
        %464 = vmatpush1.bf16.msra.mxu0 %v311
        %465 = vmatprep.subr.bf16.mxu0 0
        %466 = vmatpush1.bf16.msra.mxu0 %v312
        %467 = vmatprep.subr.bf16.mxu0 0
        %468 = vmatpush1.bf16.msra.mxu0 0
        %469 = vmatprep.subr.bf16.mxu0 0
        %470 = vmatpush1.bf16.msra.mxu0 0
        %471 = vmatprep.subr.bf16.mxu0 0
        %472 = vmatpush1.bf16.msra.mxu0 0
        %473 = vmatprep.subr.bf16.mxu0 0
        %474 = vmatpush1.bf16.msra.mxu0 0
        %475 = vmatprep.subr.bf16.mxu0 0
        %476 = vmatpush1.bf16.msra.mxu0 0
        %477 = vmatprep.subr.bf16.mxu0 0
        %478 = vmatpush1.bf16.msra.mxu0 0
        %479 = vmatprep.subr.bf16.mxu0 0
        %480 = vmatpush1.bf16.msra.mxu0 0
        %481 = vmatprep.subr.bf16.mxu0 0
        %482 = vmatpush1.bf16.msra.mxu0 0
        %483 = vmatprep.subr.bf16.mxu0 0
        %484 = vmatpush1.bf16.msra.mxu0 0
        %485 = vmatprep.subr.bf16.mxu0 0
        %486 = vmatpush1.bf16.msra.mxu0 0
        %487 = vmatprep.subr.bf16.mxu0 0
        %488 = vmatpush1.bf16.msra.mxu0 0
        %489 = vmatprep.subr.bf16.mxu0 0
        %490 = vmatpush1.bf16.msra.mxu0 0
        %491 = vmatprep.subr.bf16.mxu0 0
        %492 = vmatpush1.bf16.msra.mxu0 0
        %493 = vmatprep.subr.bf16.mxu0 0
        %494 = vmatpush1.bf16.msra.mxu0 0
        %495 = vmatprep.mubr.bf16.mxu0 0
        %496 = vmatmul.mubr.bf16.gmra.mrb[0].mxu0 %v458
        %v497 = vpop.f32.mrb[0].mxu0
        %v498 = vadd.f32 %v432, %v497
        %v499 = vpop.f32.mrb[0].mxu0
        %v500 = vpop.f32.mrb[0].mxu0
        %v501 = vadd.f32 %v435, %v500
        %v502 = vpop.f32.mrb[0].mxu0
        %503 = vmatprep.mubr.bf16.mxu0 0
        %504 = vmatmul.mubr.bf16.gmra.mrb[0].mxu0 %v461
        %v505 = vpop.f32.mrb[0].mxu0
        %v506 = vadd.f32 %v440, %v505
        %v507 = vpop.f32.mrb[0].mxu0
        %v508 = vpop.f32.mrb[0].mxu0
        %v509 = vadd.f32 %v443, %v508
        %v510 = vpop.f32.mrb[0].mxu0
        %511 = vdwg.mxu0
        %vm512 = vcmask 523264
        %v513 = vsel %vm512, %v498, 0.0
        %v514 = vsel %vm512, %v501, 0.0
        %v515 = vadd.f32 %v513, %v514
        %v516 = vsel %vm512, %v506, 0.0
        %v517 = vadd.f32 %v515, %v516
        %v518 = vsel %vm512, %v509, 0.0
        %v519 = vadd.f32 %v517, %v518
        %v520 = vrot.slane %v519, 4
        %v521 = vadd.f32 %v519, %v520
        %v522 = vrot.slane %v521, 2
        %v523 = vadd.f32 %v521, %v522
        %v524 = vrot.slane %v523, 1
        %v525 = vadd.f32 %v523, %v524
        %v526 = vrcp.pop 32.0
        %v527 = vmul.f32 %v525, %v526
        %v528 = vsub.f32 %v498, %v527
        %v529 = vsub.f32 %v501, %v527
        %v530 = vsub.f32 %v506, %v527
        %v531 = vsub.f32 %v509, %v527
        %v532 = vmul.f32 %v528, %v528
        %v533 = vmul.f32 %v529, %v529
        %v534 = vmul.f32 %v530, %v530
        %v535 = vmul.f32 %v531, %v531
        %v536 = vsel %vm512, %v532, 0.0
        %v537 = vsel %vm512, %v533, 0.0
        %v538 = vadd.f32 %v536, %v537
        %v539 = vsel %vm512, %v534, 0.0
        %v540 = vadd.f32 %v538, %v539
        %v541 = vsel %vm512, %v535, 0.0
        %v542 = vadd.f32 %v540, %v541
        %v543 = vrot.slane %v542, 4
        %v544 = vadd.f32 %v542, %v543
        %v545 = vrot.slane %v544, 2
        %v546 = vadd.f32 %v544, %v545
        %v547 = vrot.slane %v546, 1
        %v548 = vadd.f32 %v546, %v547
        %v549 = vmul.f32 %v548, %v526
        %v550 = vadd.f32 %v549, 1e-06
        %v551 = vrsqrt.pop %v550
        %v552 = vld [vmem:[%s4] sm:$0xff]
        %v553 = vld [vmem:[%s4 + $0x8] sm:$0xff]
        %v554 = vld [vmem:[%s4 + $0x10] sm:$0xff]
        %v555 = vld [vmem:[%s4 + $0x18] sm:$0xff]
        %557 = vset.pattern.permute.xlu0 0
        %558 = vperm.xlu0 %557, %v552
        %v559 = vpop.permute.xlu0 %558
        %562 = vset.pattern.permute.xlu0 0
        %563 = vperm.xlu0 %562, %v553
        %v564 = vpop.permute.xlu0 %563
        %567 = vset.pattern.permute.xlu0 0
        %568 = vperm.xlu0 %567, %v554
        %v569 = vpop.permute.xlu0 %568
        %572 = vset.pattern.permute.xlu0 0
        %573 = vperm.xlu0 %572, %v555
        %v574 = vpop.permute.xlu0 %573
        %v576 = vmul.f32 %v559, %v551
        %v577 = vmul.f32 %v564, %v551
        %v578 = vmul.f32 %v569, %v551
        %v579 = vmul.f32 %v574, %v551
        %v580 = vmul.f32 %v528, %v576
        %v581 = vmul.f32 %v529, %v577
        %v582 = vmul.f32 %v530, %v578
        %v583 = vmul.f32 %v531, %v579
        %v584 = vld [vmem:[%s5] sm:$0xff]
        %v585 = vld [vmem:[%s5 + $0x8] sm:$0xff]
        %v586 = vld [vmem:[%s5 + $0x10] sm:$0xff]
        %v587 = vld [vmem:[%s5 + $0x18] sm:$0xff]
        %589 = vset.pattern.permute.xlu0 0
        %590 = vperm.xlu0 %589, %v584
        %v591 = vpop.permute.xlu0 %590
        %594 = vset.pattern.permute.xlu0 0
        %595 = vperm.xlu0 %594, %v585
        %v596 = vpop.permute.xlu0 %595
        %599 = vset.pattern.permute.xlu0 0
        %600 = vperm.xlu0 %599, %v586
        %v601 = vpop.permute.xlu0 %600
        %604 = vset.pattern.permute.xlu0 0
        %605 = vperm.xlu0 %604, %v587
        %v606 = vpop.permute.xlu0 %605
        %v608 = vadd.f32 %v580, %v591
        %v609 = vadd.f32 %v581, %v596
        %v610 = vadd.f32 %v582, %v601
        %v611 = vadd.f32 %v583, %v606
        %612 = vst.msk [vmem:[%s289] sm:$0xff] %vm512, %v608
        %613 = vst.msk [vmem:[%s289 + $0x8] sm:$0xff] %vm512, %v609
        %614 = vst.msk [vmem:[%s289 + $0x10] sm:$0xff] %vm512, %v610
        %615 = vst.msk [vmem:[%s289 + $0x18] sm:$0xff] %vm512, %v611
        %s616 = sand.u32 %s182, 1
        %s617 = scalar_lea.sflag [#allocation3], %s616
        %s618 = sand.u32 %s182, 1
        %s619 = smul.addr %s618, 32
        %s620 = scalar_lea.vmem [#allocation2], %s619
        // Predicated region
        $region45: #{tpu_custom_call.1} parent=43 // pred_check
          %p621 = pneg %p192
        $region46: #{tpu_custom_call.1} parent=43 // pred_check_branch
          %623 = sbr.rel (%p621) target = $region48
        $region47: #{tpu_custom_call.1} parent=43 // pred_region
          %s625 = ssub.s32 512, 512
          %626 = vsyncadd %s617, %s625
          %s627 = smul.addr %s24, 4
          %s628 = sadd.s32 %s25, %s627
          %s629 = smul.addr %s628, 128
          %s630 = scalar_lea.hbm %s6, %s629
          %s631 = sshll.u32 %s620, 4
          %s632 = int_to_ptr.vmem [resolvable:$true] %s631
          %637 = dma.vmem_to_hbm [thread:$0]  %s632, 512, %s630, %s617, 128, 128, 8
        $region48: #{tpu_custom_call.1} parent=43 // pred_fallthru
          _
      $region44: #{tpu_custom_call.1} parent=5 // pred_fallthru
        _
      %p638 = scmp.le.s32.totalorder 2, %s15
      // Predicated region
      $region49: #{tpu_custom_call.1} parent=5 // pred_check
        %p639 = pneg %p638
      $region50: #{tpu_custom_call.1} parent=5 // pred_check_branch
        %641 = sbr.rel (%p639) target = $region52
      $region51: #{tpu_custom_call.1} parent=5 // pred_region
        %s642 = ssub.s32 %s15, 2
        // Predicated region
        $region53: #{tpu_custom_call.1} parent=51 // pred_check
          %p643 = pneg %p198
        $region54: #{tpu_custom_call.1} parent=51 // pred_check_branch
          %645 = sbr.rel (%p643) target = $region56
        $region55: #{tpu_custom_call.1} parent=51 // pred_region
          %s646 = sand.u32 %s183, 1
          %s647 = scalar_lea.sflag [#allocation3], %s646
          %s648 = sand.u32 %s183, 1
          %s649 = smul.addr %s648, 32
          %s650 = scalar_lea.vmem [#allocation2], %s649
          %651 = dma.done %s647, 512
        $region56: #{tpu_custom_call.1} parent=51 // pred_fallthru
          _
      $region52: #{tpu_custom_call.1} parent=5 // pred_fallthru
        _
    $region6: #{tpu_custom_call.1} parent=1 // loop_footer
      %s19 = sadd.s32 1, %s15
    $region7: #{tpu_custom_call.1} parent=1 // loop_footer_branch
      %14 = sbr.rel target = $region3
    $region8: #{tpu_custom_call.1} parent=1 // loop_exit
      _
    %652 = vsyncpa [#allocation3], 1
    %s653 = scalar_lea.sflag [#allocation3], 1
    %654 = vsyncpa %s653, 1

// kernel: tpu_custom_call.1
$region0: #{tpu_custom_call.1}
  #allocation0 [shape = 'u32[]', space=smem, size = 0x4, offset = 0x4, fixed_abs, tag = 'smem constant byte address 0x4 - core index']
  #allocation1 [shape = 'u32[144,128]{1,0:T(1,128)}', space=vmem, size = 0x12000, scoped, tag = 'internal scratch']
  %s0 = inlined_call_operand.vmem [shape: f32[2,32,64], index: 0, kind: input, shape index: {}]
  %s1 = inlined_call_operand.vmem [shape: bf16[2,128,64], index: 1, kind: input, shape index: {}]
  %s2 = inlined_call_operand.vmem [shape: bf16[32,32], index: 2, kind: input, shape index: {}]
  %s3 = inlined_call_operand.vmem [shape: bf16[32,128], index: 3, kind: input, shape index: {}]
  %s4 = inlined_call_operand.vmem [shape: f32[32,1], index: 4, kind: input, shape index: {}]
  %s5 = inlined_call_operand.vmem [shape: f32[32,1], index: 5, kind: input, shape index: {}]
  %s6 = inlined_call_operand.hbm [shape: f32[2,32,64], index: 6, kind: output, shape index: {}]
  %s7 = sld [smem:[#allocation0]]
  $region57: #{tpu_custom_call.1} parent=0
    _
  %s9 = ssub.s32 1, %s7
  %s10 = scalar_select 0, %s9, %s7
  $region1: #{tpu_custom_call.1} parent=0
    #allocation2 [shape = 'u8[32768]{0}', space=vmem, size = 0x8000, scoped, tag = 'output window, operand 0']
    #allocation3 [shape = 's32[2]{0}', space=sflag, size = 0x8, scoped, tag = 'scoped memory for tpu_custom_call.1']
    %11 = vsyncpa [#allocation3], 0
    %s12 = scalar_lea.sflag [#allocation3], 1
    %13 = vsyncpa %s12, 0
    loop: start=0, step=1, limit=4
    $region2: #{tpu_custom_call.1} parent=1 // loop_pre_header
      _
    $region3: #{tpu_custom_call.1} parent=1 // loop_header
      %s15 = sphi 0, %s19
      %p16 = scmp.ge.s32.totalorder %s15, 4
      %s22 = sphi 0, %s34
      %s23 = sphi 0, %s30
      %s24 = sphi 0, %s22
      %s25 = sphi 0, %s23
      %s26 = sphi 0, %s24
      %s27 = sphi 0, %s25
      %s39 = sphi 0, %s41
      %s42 = sphi 0, %s39
      %s43 = sphi 0, %s42
      %s59 = sphi 0, %s43
      %s67 = sphi 0, %s69
      %s70 = sphi 0, %s67
      %s71 = sphi 0, %s70
      %s87 = sphi 0, %s71
      %s91 = sphi 0, %s91
      %s93 = sphi 0, %s91
      %s94 = sphi 0, %s93
      %s108 = sphi 0, %s94
      %s112 = sphi 0, %s112
      %s114 = sphi 0, %s112
      %s115 = sphi 0, %s114
      %s129 = sphi 0, %s115
      %s133 = sphi 0, %s133
      %s135 = sphi 0, %s133
      %s136 = sphi 0, %s135
      %s150 = sphi 0, %s136
      %s154 = sphi 0, %s154
      %s156 = sphi 0, %s154
      %s157 = sphi 0, %s156
      %s171 = sphi 0, %s157
      %s179 = sphi 0, %s181
      %s182 = sphi 0, %s179
      %s183 = sphi 0, %s182
      %s199 = sphi 0, %s183
    $region4: #{tpu_custom_call.1} parent=1 // loop_header_branch
      %18 = sbr.rel (%p16) target = $region8
    $region5: #{tpu_custom_call.1} parent=1 // loop_body
      %s20 = ssub.s32 %s15, 1
      %s21 = ssub.s32 %s15, 2
      %s28 = sadd.s32 1, %s23
      %p29 = scmp.ge.s32.totalorder %s28, 1
      %s30 = scalar_select %p29, 0, %s28
      %s31 = sadd.s32 1, %s22
      %s32 = scalar_select %p29, %s31, %s22
      %p33 = scmp.ge.s32.totalorder %s32, 2
      %s34 = scalar_select %p33, 0, %s32
      %s35 = ssub.s32 %s22, %s34
      %s36 = ssub.s32 %s23, %s30
      %s37 = sor.u32 %s35, %s36
      %p38 = scmp.eq.s32.totalorder %s37, 0
      %s40 = sadd.s32 %s39, 1
      %s41 = scalar_select %p38, %s39, %s40
      %p44 = pneg %p38
      %p45 = scmp.eq.s32.totalorder %s15, 1
      %p46 = por %p44, %p45
      %p47 = scmp.ne.s32.totalorder %s39, %s42
      %p48 = scmp.eq.s32.totalorder %s15, 0
      %p49 = por %p47, %p48
      %p50 = scmp.ne.s32.totalorder %s39, %s42
      %p51 = scmp.eq.s32.totalorder %s20, 1
      %p52 = por %p50, %p51
      %p53 = scmp.ne.s32.totalorder %s42, %s43
      %p54 = scmp.eq.s32.totalorder %s20, 0
      %p55 = por %p53, %p54
      %p56 = scmp.ne.s32.totalorder %s42, %s43
      %p57 = scmp.eq.s32.totalorder %s21, 1
      %p58 = por %p56, %p57
      %p60 = scmp.ne.s32.totalorder %s43, %s59
      %p61 = scmp.eq.s32.totalorder %s21, 0
      %p62 = por %p60, %p61
      %s63 = ssub.s32 %s22, %s34
      %s64 = ssub.s32 %s23, %s30
      %s65 = sor.u32 %s63, %s64
      %p66 = scmp.eq.s32.totalorder %s65, 0
      %s68 = sadd.s32 %s67, 1
      %s69 = scalar_select %p66, %s67, %s68
      %p72 = pneg %p66
      %p73 = scmp.eq.s32.totalorder %s15, 1
      %p74 = por %p72, %p73
      %p75 = scmp.ne.s32.totalorder %s67, %s70
      %p76 = scmp.eq.s32.totalorder %s15, 0
      %p77 = por %p75, %p76
      %p78 = scmp.ne.s32.totalorder %s67, %s70
      %p79 = scmp.eq.s32.totalorder %s20, 1
      %p80 = por %p78, %p79
      %p81 = scmp.ne.s32.totalorder %s70, %s71
      %p82 = scmp.eq.s32.totalorder %s20, 0
      %p83 = por %p81, %p82
      %p84 = scmp.ne.s32.totalorder %s70, %s71
      %p85 = scmp.eq.s32.totalorder %s21, 1
      %p86 = por %p84, %p85
      %p88 = scmp.ne.s32.totalorder %s71, %s87
      %p89 = scmp.eq.s32.totalorder %s21, 0
      %p90 = por %p88, %p89
      %s92 = sadd.s32 %s91, 1
      %p95 = scmp.eq.s32.totalorder %s15, 1
      %p96 = scmp.ne.s32.totalorder %s91, %s93
      %p97 = scmp.eq.s32.totalorder %s15, 0
      %p98 = por %p96, %p97
      %p99 = scmp.ne.s32.totalorder %s91, %s93
      %p100 = scmp.eq.s32.totalorder %s20, 1
      %p101 = por %p99, %p100
      %p102 = scmp.ne.s32.totalorder %s93, %s94
      %p103 = scmp.eq.s32.totalorder %s20, 0
      %p104 = por %p102, %p103
      %p105 = scmp.ne.s32.totalorder %s93, %s94
      %p106 = scmp.eq.s32.totalorder %s21, 1
      %p107 = por %p105, %p106
      %p109 = scmp.ne.s32.totalorder %s94, %s108
      %p110 = scmp.eq.s32.totalorder %s21, 0
      %p111 = por %p109, %p110
      %s113 = sadd.s32 %s112, 1
      %p116 = scmp.eq.s32.totalorder %s15, 1
      %p117 = scmp.ne.s32.totalorder %s112, %s114
      %p118 = scmp.eq.s32.totalorder %s15, 0
      %p119 = por %p117, %p118
      %p120 = scmp.ne.s32.totalorder %s112, %s114
      %p121 = scmp.eq.s32.totalorder %s20, 1
      %p122 = por %p120, %p121
      %p123 = scmp.ne.s32.totalorder %s114, %s115
      %p124 = scmp.eq.s32.totalorder %s20, 0
      %p125 = por %p123, %p124
      %p126 = scmp.ne.s32.totalorder %s114, %s115
      %p127 = scmp.eq.s32.totalorder %s21, 1
      %p128 = por %p126, %p127
      %p130 = scmp.ne.s32.totalorder %s115, %s129
      %p131 = scmp.eq.s32.totalorder %s21, 0
      %p132 = por %p130, %p131
      %s134 = sadd.s32 %s133, 1
      %p137 = scmp.eq.s32.totalorder %s15, 1
      %p138 = scmp.ne.s32.totalorder %s133, %s135
      %p139 = scmp.eq.s32.totalorder %s15, 0
      %p140 = por %p138, %p139
      %p141 = scmp.ne.s32.totalorder %s133, %s135
      %p142 = scmp.eq.s32.totalorder %s20, 1
      %p143 = por %p141, %p142
      %p144 = scmp.ne.s32.totalorder %s135, %s136
      %p145 = scmp.eq.s32.totalorder %s20, 0
      %p146 = por %p144, %p145
      %p147 = scmp.ne.s32.totalorder %s135, %s136
      %p148 = scmp.eq.s32.totalorder %s21, 1
      %p149 = por %p147, %p148
      %p151 = scmp.ne.s32.totalorder %s136, %s150
      %p152 = scmp.eq.s32.totalorder %s21, 0
      %p153 = por %p151, %p152
      %s155 = sadd.s32 %s154, 1
      %p158 = scmp.eq.s32.totalorder %s15, 1
      %p159 = scmp.ne.s32.totalorder %s154, %s156
      %p160 = scmp.eq.s32.totalorder %s15, 0
      %p161 = por %p159, %p160
      %p162 = scmp.ne.s32.totalorder %s154, %s156
      %p163 = scmp.eq.s32.totalorder %s20, 1
      %p164 = por %p162, %p163
      %p165 = scmp.ne.s32.totalorder %s156, %s157
      %p166 = scmp.eq.s32.totalorder %s20, 0
      %p167 = por %p165, %p166
      %p168 = scmp.ne.s32.totalorder %s156, %s157
      %p169 = scmp.eq.s32.totalorder %s21, 1
      %p170 = por %p168, %p169
      %p172 = scmp.ne.s32.totalorder %s157, %s171
      %p173 = scmp.eq.s32.totalorder %s21, 0
      %p174 = por %p172, %p173
      %s175 = ssub.s32 %s22, %s34
      %s176 = ssub.s32 %s23, %s30
      %s177 = sor.u32 %s175, %s176
      %p178 = scmp.eq.s32.totalorder %s177, 0
      %s180 = sadd.s32 %s179, 1
      %s181 = scalar_select %p178, %s179, %s180
      %p184 = pneg %p178
      %p185 = scmp.eq.s32.totalorder %s15, 1
      %p186 = por %p184, %p185
      %p187 = scmp.ne.s32.totalorder %s179, %s182
      %p188 = scmp.eq.s32.totalorder %s15, 0
      %p189 = por %p187, %p188
      %p190 = scmp.ne.s32.totalorder %s179, %s182
      %p191 = scmp.eq.s32.totalorder %s20, 1
      %p192 = por %p190, %p191
      %p193 = scmp.ne.s32.totalorder %s182, %s183
      %p194 = scmp.eq.s32.totalorder %s20, 0
      %p195 = por %p193, %p194
      %p196 = scmp.ne.s32.totalorder %s182, %s183
      %p197 = scmp.eq.s32.totalorder %s21, 1
      %p198 = por %p196, %p197
      %p200 = scmp.ne.s32.totalorder %s183, %s199
      %p201 = scmp.eq.s32.totalorder %s21, 0
      %p202 = por %p200, %p201
      %p203 = scmp.le.s32.totalorder 1, %s15
      %p204 = scmp.lt.s32.totalorder %s15, 3
      %p205 = pnand %p203, %p204
      %p206 = pneg %p205
      // Predicated region
      $region9: #{tpu_custom_call.1} parent=5 // pred_check
        _
      $region10: #{tpu_custom_call.1} parent=5 // pred_check_branch
        %208 = sbr.rel (%p205) target = $region12
      $region11: #{tpu_custom_call.1} parent=5 // pred_region
        %s209 = ssub.s32 %s15, 1
        // Predicated region
        $region13: #{tpu_custom_call.1} parent=11 // pred_check
          %p210 = pneg %p104
        $region14: #{tpu_custom_call.1} parent=11 // pred_check_branch
          %212 = sbr.rel (%p210) target = $region16
        $region15: #{tpu_custom_call.1} parent=11 // pred_region
          _
        $region16: #{tpu_custom_call.1} parent=11 // pred_fallthru
          _
        // Predicated region
        $region17: #{tpu_custom_call.1} parent=11 // pred_check
          %p213 = pneg %p125
        $region18: #{tpu_custom_call.1} parent=11 // pred_check_branch
          %215 = sbr.rel (%p213) target = $region20
        $region19: #{tpu_custom_call.1} parent=11 // pred_region
          _
        $region20: #{tpu_custom_call.1} parent=11 // pred_fallthru
          _
        // Predicated region
        $region21: #{tpu_custom_call.1} parent=11 // pred_check
          %p216 = pneg %p146
        $region22: #{tpu_custom_call.1} parent=11 // pred_check_branch
          %218 = sbr.rel (%p216) target = $region24
        $region23: #{tpu_custom_call.1} parent=11 // pred_region
          _
        $region24: #{tpu_custom_call.1} parent=11 // pred_fallthru
          _
        // Predicated region
        $region25: #{tpu_custom_call.1} parent=11 // pred_check
          %p219 = pneg %p167
        $region26: #{tpu_custom_call.1} parent=11 // pred_check_branch
          %221 = sbr.rel (%p219) target = $region28
        $region27: #{tpu_custom_call.1} parent=11 // pred_region
          _
        $region28: #{tpu_custom_call.1} parent=11 // pred_fallthru
          _
      $region12: #{tpu_custom_call.1} parent=5 // pred_fallthru
        _
      %p222 = scmp.lt.s32.totalorder %s15, 2
      // Predicated region
      $region29: #{tpu_custom_call.1} parent=5 // pred_check
        %p223 = pneg %p222
      $region30: #{tpu_custom_call.1} parent=5 // pred_check_branch
        %225 = sbr.rel (%p223) target = $region32
      $region31: #{tpu_custom_call.1} parent=5 // pred_region
        // Predicated region
        $region33: #{tpu_custom_call.1} parent=31 // pred_check
          %p226 = pneg %p49
        $region34: #{tpu_custom_call.1} parent=31 // pred_check_branch
          %228 = sbr.rel (%p226) target = $region36
        $region35: #{tpu_custom_call.1} parent=31 // pred_region
          %p229 = scmp.lt.s32.totalorder %s22, 1
          %s230 = scalar_select %p229, %s22, 1
          %p231 = scmp.lt.s32.totalorder %s23, 0
          %s232 = scalar_select %p231, %s23, 0
          %s233 = smul.addr %s230, 4
          %s234 = sadd.s32 %s232, %s233
          %s235 = smul.addr %s234, 8
          %s236 = scalar_lea.vmem %s0, %s235
        $region36: #{tpu_custom_call.1} parent=31 // pred_fallthru
          _
        // Predicated region
        $region37: #{tpu_custom_call.1} parent=31 // pred_check
          %p237 = pneg %p77
        $region38: #{tpu_custom_call.1} parent=31 // pred_check_branch
          %239 = sbr.rel (%p237) target = $region40
        $region39: #{tpu_custom_call.1} parent=31 // pred_region
          %p240 = scmp.lt.s32.totalorder %s22, 1
          %s241 = scalar_select %p240, %s22, 1
          %p242 = scmp.lt.s32.totalorder %s23, 0
          %s243 = scalar_select %p242, %s23, 0
          %s244 = smul.addr %s241, 16
          %s245 = sadd.s32 %s243, %s244
          %s246 = smul.addr %s245, 4
          %s247 = scalar_lea.vmem %s1, %s246
        $region40: #{tpu_custom_call.1} parent=31 // pred_fallthru
          _
      $region32: #{tpu_custom_call.1} parent=5 // pred_fallthru
        _
      %p248 = scmp.le.s32.totalorder 1, %s15
      %p249 = scmp.lt.s32.totalorder %s15, 3
      %p250 = pnand %p248, %p249
      %p251 = pneg %p250
      // Predicated region
      $region41: #{tpu_custom_call.1} parent=5 // pred_check
        _
      $region42: #{tpu_custom_call.1} parent=5 // pred_check_branch
        %253 = sbr.rel (%p250) target = $region44
      $region43: #{tpu_custom_call.1} parent=5 // pred_region
        %s254 = ssub.s32 %s15, 1
        %p255 = scmp.lt.s32.totalorder %s24, 1
        %s256 = scalar_select %p255, %s24, 1
        %p257 = scmp.lt.s32.totalorder %s25, 0
        %s258 = scalar_select %p257, %s25, 0
        %s259 = smul.addr %s256, 4
        %s260 = sadd.s32 %s258, %s259
        %s261 = smul.addr %s260, 8
        %s262 = scalar_lea.vmem %s0, %s261
        %p263 = pneg %p55
        %p264 = pneg %p52
        %p265 = scmp.lt.s32.totalorder %s24, 1
        %s266 = scalar_select %p265, %s24, 1
        %p267 = scmp.lt.s32.totalorder %s25, 0
        %s268 = scalar_select %p267, %s25, 0
        %s269 = smul.addr %s266, 16
        %s270 = sadd.s32 %s268, %s269
        %s271 = smul.addr %s270, 4
        %s272 = scalar_lea.vmem %s1, %s271
        %p273 = pneg %p83
        %p274 = pneg %p80
        %p275 = pneg %p104
        %p276 = pneg %p101
        %p277 = pneg %p125
        %p278 = pneg %p122
        %p279 = pneg %p146
        %p280 = pneg %p143
        %p281 = pneg %p167
        %p282 = pneg %p164
        %p283 = pneg %p195
        %p284 = pneg %p192
        %s285 = sand.u32 %s182, 1
        %s286 = scalar_lea.sflag [#allocation3], %s285
        %s287 = sand.u32 %s182, 1
        %s288 = smul.addr %s287, 32
        %s289 = scalar_lea.vmem [#allocation2], %s288
        %p290 = scmp.lt.s32.totalorder %s24, 1
        %s291 = scalar_select %p290, %s24, 1
        %p292 = scmp.lt.s32.totalorder %s25, 0
        %s293 = scalar_select %p292, %s25, 0
        %s294 = smul.addr %s291, 4
        %s295 = sadd.s32 %s293, %s294
        %s296 = smul.addr %s295, 8
        %s297 = scalar_lea.vmem %s0, %s296
        %p298 = scmp.lt.s32.totalorder %s24, 1
        %s299 = scalar_select %p298, %s24, 1
        %p300 = scmp.lt.s32.totalorder %s25, 0
        %s301 = scalar_select %p300, %s25, 0
        %s302 = smul.addr %s299, 16
        %s303 = sadd.s32 %s301, %s302
        %s304 = smul.addr %s303, 4
        %s305 = scalar_lea.vmem %s1, %s304
        %v307 = vld [vmem:[%s297] sm:$0xff]
        %v308 = vld [vmem:[%s297 + $0x8] sm:$0xff]
        %v309 = vld [vmem:[%s297 + $0x10] sm:$0xff]
        %v310 = vld [vmem:[%s297 + $0x18] sm:$0xff]
        %v311 = vpack.c.bf16 %v308, %v307
        %v312 = vpack.c.bf16 %v310, %v309
        %v313 = vld [vmem:[%s2] sm:$0xf]
        %v314 = vld [vmem:[%s2 + $0x4] sm:$0xf]
        %v315 = vld [vmem:[%s2 + $0x8] sm:$0xf]
        %v316 = vld [vmem:[%s2 + $0xc] sm:$0xf]
        %v317 = vld [vmem:[%s3] sm:$0xf]
        %v318 = vld [vmem:[%s3 + $0x4] sm:$0xf]
        %v319 = vld [vmem:[%s3 + $0x8] sm:$0xf]
        %v320 = vld [vmem:[%s3 + $0xc] sm:$0xf]
        %v321 = vld [vmem:[%s305] sm:$0xf]
        %v322 = vld [vmem:[%s305 + $0x4] sm:$0xf]
        %v323 = vld [vmem:[%s305 + $0x8] sm:$0xf]
        %v324 = vld [vmem:[%s305 + $0xc] sm:$0xf]
        %v325 = vld [vmem:[%s305 + $0x10] sm:$0xf]
        %v326 = vld [vmem:[%s305 + $0x14] sm:$0xf]
        %v327 = vld [vmem:[%s305 + $0x18] sm:$0xf]
        %v328 = vld [vmem:[%s305 + $0x1c] sm:$0xf]
        %v329 = vld [vmem:[%s305 + $0x20] sm:$0xf]
        %v330 = vld [vmem:[%s305 + $0x24] sm:$0xf]
        %v331 = vld [vmem:[%s305 + $0x28] sm:$0xf]
        %v332 = vld [vmem:[%s305 + $0x2c] sm:$0xf]
        %v333 = vld [vmem:[%s305 + $0x30] sm:$0xf]
        %v334 = vld [vmem:[%s305 + $0x34] sm:$0xf]
        %v335 = vld [vmem:[%s305 + $0x38] sm:$0xf]
        %v336 = vld [vmem:[%s305 + $0x3c] sm:$0xf]
        %v341 = vunpack.c.l.b16 %v317
        %v342 = vunpack.c.l.b16 %v318
        %v343 = vunpack.c.l.b16 %v319
        %v344 = vunpack.c.l.b16 %v320
        %v345 = vpack.c.b16 %v342, %v341
        %v346 = vpack.c.b16 %v344, %v343
        %v365 = vunpack.c.l.b16 %v321
        %v366 = vunpack.c.l.b16 %v322
        %v367 = vunpack.c.l.b16 %v323
        %v368 = vunpack.c.l.b16 %v324
        %v369 = vunpack.c.l.b16 %v325
        %v370 = vunpack.c.l.b16 %v326
        %v371 = vunpack.c.l.b16 %v327
        %v372 = vunpack.c.l.b16 %v328
        %v373 = vunpack.c.l.b16 %v329
        %v374 = vunpack.c.l.b16 %v330
        %v375 = vunpack.c.l.b16 %v331
        %v376 = vunpack.c.l.b16 %v332
        %v377 = vunpack.c.l.b16 %v333
        %v378 = vunpack.c.l.b16 %v334
        %v379 = vunpack.c.l.b16 %v335
        %v380 = vunpack.c.l.b16 %v336
        %v381 = vpack.c.b16 %v366, %v365
        %v382 = vpack.c.b16 %v368, %v367
        %v383 = vpack.c.b16 %v370, %v369
        %v384 = vpack.c.b16 %v372, %v371
        %v385 = vpack.c.b16 %v374, %v373
        %v386 = vpack.c.b16 %v376, %v375
        %v387 = vpack.c.b16 %v378, %v377
        %v388 = vpack.c.b16 %v380, %v379
        %397 = vmatprep.subr.bf16.mxu0 0
        %398 = vmatpush1.bf16.msra.mxu0 %v381
        %399 = vmatprep.subr.bf16.mxu0 0
        %400 = vmatpush1.bf16.msra.mxu0 %v382
        %401 = vmatprep.subr.bf16.mxu0 0
        %402 = vmatpush1.bf16.msra.mxu0 %v383
        %403 = vmatprep.subr.bf16.mxu0 0
        %404 = vmatpush1.bf16.msra.mxu0 %v384
        %405 = vmatprep.subr.bf16.mxu0 0
        %406 = vmatpush1.bf16.msra.mxu0 %v385
        %407 = vmatprep.subr.bf16.mxu0 0
        %408 = vmatpush1.bf16.msra.mxu0 %v386
        %409 = vmatprep.subr.bf16.mxu0 0
        %410 = vmatpush1.bf16.msra.mxu0 %v387
        %411 = vmatprep.subr.bf16.mxu0 0
        %412 = vmatpush1.bf16.msra.mxu0 %v388
        %413 = vmatprep.subr.bf16.mxu0 0
        %414 = vmatpush1.bf16.msra.mxu0 0
        %415 = vmatprep.subr.bf16.mxu0 0
        %416 = vmatpush1.bf16.msra.mxu0 0
        %417 = vmatprep.subr.bf16.mxu0 0
        %418 = vmatpush1.bf16.msra.mxu0 0
        %419 = vmatprep.subr.bf16.mxu0 0
        %420 = vmatpush1.bf16.msra.mxu0 0
        %421 = vmatprep.subr.bf16.mxu0 0
        %422 = vmatpush1.bf16.msra.mxu0 0
        %423 = vmatprep.subr.bf16.mxu0 0
        %424 = vmatpush1.bf16.msra.mxu0 0
        %425 = vmatprep.subr.bf16.mxu0 0
        %426 = vmatpush1.bf16.msra.mxu0 0
        %427 = vmatprep.subr.bf16.mxu0 0
        %428 = vmatpush1.bf16.msra.mxu0 0
        %429 = vmatprep.mubr.bf16.mxu0 0
        %430 = vmatmul.mubr.bf16.gmra.mrb[0].mxu0 %v345
        %v431 = vpop.f32.mrb[0].mxu0
        %v432 = vadd.f32 0.0, %v431
        %v433 = vpop.f32.mrb[0].mxu0
        %v434 = vpop.f32.mrb[0].mxu0
        %v435 = vadd.f32 0.0, %v434
        %v436 = vpop.f32.mrb[0].mxu0
        %437 = vmatprep.mubr.bf16.mxu0 0
        %438 = vmatmul.mubr.bf16.gmra.mrb[0].mxu0 %v346
        %v439 = vpop.f32.mrb[0].mxu0
        %v440 = vadd.f32 0.0, %v439
        %v441 = vpop.f32.mrb[0].mxu0
        %v442 = vpop.f32.mrb[0].mxu0
        %v443 = vadd.f32 0.0, %v442
        %v444 = vpop.f32.mrb[0].mxu0
        %445 = vdwg.mxu0
        %v450 = vunpack.c.l.b16 %v313
        %v451 = vunpack.c.l.b16 %v314
        %v452 = vunpack.c.l.b16 %v315
        %v453 = vunpack.c.l.b16 %v316
        %v454 = vpack.c.b16 %v451, %v450
        %v455 = vpack.c.b16 %v453, %v452
        %vm456 = vcmask 261120
        %v458 = vsel %vm456, %v454, 0
        %v461 = vsel %vm456, %v455, 0
        %463 = vmatprep.subr.bf16.mxu0 0
        %464 = vmatpush1.bf16.msra.mxu0 %v311
        %465 = vmatprep.subr.bf16.mxu0 0
        %466 = vmatpush1.bf16.msra.mxu0 %v312
        %467 = vmatprep.subr.bf16.mxu0 0
        %468 = vmatpush1.bf16.msra.mxu0 0
        %469 = vmatprep.subr.bf16.mxu0 0
        %470 = vmatpush1.bf16.msra.mxu0 0
        %471 = vmatprep.subr.bf16.mxu0 0
        %472 = vmatpush1.bf16.msra.mxu0 0
        %473 = vmatprep.subr.bf16.mxu0 0
        %474 = vmatpush1.bf16.msra.mxu0 0
        %475 = vmatprep.subr.bf16.mxu0 0
        %476 = vmatpush1.bf16.msra.mxu0 0
        %477 = vmatprep.subr.bf16.mxu0 0
        %478 = vmatpush1.bf16.msra.mxu0 0
        %479 = vmatprep.subr.bf16.mxu0 0
        %480 = vmatpush1.bf16.msra.mxu0 0
        %481 = vmatprep.subr.bf16.mxu0 0
        %482 = vmatpush1.bf16.msra.mxu0 0
        %483 = vmatprep.subr.bf16.mxu0 0
        %484 = vmatpush1.bf16.msra.mxu0 0
        %485 = vmatprep.subr.bf16.mxu0 0
        %486 = vmatpush1.bf16.msra.mxu0 0
        %487 = vmatprep.subr.bf16.mxu0 0
        %488 = vmatpush1.bf16.msra.mxu0 0
        %489 = vmatprep.subr.bf16.mxu0 0
        %490 = vmatpush1.bf16.msra.mxu0 0
        %491 = vmatprep.subr.bf16.mxu0 0
        %492 = vmatpush1.bf16.msra.mxu0 0
        %493 = vmatprep.subr.bf16.mxu0 0
        %494 = vmatpush1.bf16.msra.mxu0 0
        %495 = vmatprep.mubr.bf16.mxu0 0
        %496 = vmatmul.mubr.bf16.gmra.mrb[0].mxu0 %v458
        %v497 = vpop.f32.mrb[0].mxu0
        %v498 = vadd.f32 %v432, %v497
        %v499 = vpop.f32.mrb[0].mxu0
        %v500 = vpop.f32.mrb[0].mxu0
        %v501 = vadd.f32 %v435, %v500
        %v502 = vpop.f32.mrb[0].mxu0
        %503 = vmatprep.mubr.bf16.mxu0 0
        %504 = vmatmul.mubr.bf16.gmra.mrb[0].mxu0 %v461
        %v505 = vpop.f32.mrb[0].mxu0
        %v506 = vadd.f32 %v440, %v505
        %v507 = vpop.f32.mrb[0].mxu0
        %v508 = vpop.f32.mrb[0].mxu0
        %v509 = vadd.f32 %v443, %v508
        %v510 = vpop.f32.mrb[0].mxu0
        %511 = vdwg.mxu0
        %vm512 = vcmask 523264
        %v513 = vsel %vm512, %v498, 0.0
        %v514 = vsel %vm512, %v501, 0.0
        %v515 = vadd.f32 %v513, %v514
        %v516 = vsel %vm512, %v506, 0.0
        %v517 = vadd.f32 %v515, %v516
        %v518 = vsel %vm512, %v509, 0.0
        %v519 = vadd.f32 %v517, %v518
        %v520 = vrot.slane %v519, 4
        %v521 = vadd.f32 %v519, %v520
        %v522 = vrot.slane %v521, 2
        %v523 = vadd.f32 %v521, %v522
        %v524 = vrot.slane %v523, 1
        %v525 = vadd.f32 %v523, %v524
        %v526 = vrcp.pop 32.0
        %v527 = vmul.f32 %v525, %v526
        %v528 = vsub.f32 %v498, %v527
        %v529 = vsub.f32 %v501, %v527
        %v530 = vsub.f32 %v506, %v527
        %v531 = vsub.f32 %v509, %v527
        %v532 = vmul.f32 %v528, %v528
        %v533 = vmul.f32 %v529, %v529
        %v534 = vmul.f32 %v530, %v530
        %v535 = vmul.f32 %v531, %v531
        %v536 = vsel %vm512, %v532, 0.0
        %v537 = vsel %vm512, %v533, 0.0
        %v538 = vadd.f32 %v536, %v537
        %v539 = vsel %vm512, %v534, 0.0
        %v540 = vadd.f32 %v538, %v539
        %v541 = vsel %vm512, %v535, 0.0
        %v542 = vadd.f32 %v540, %v541
        %v543 = vrot.slane %v542, 4
        %v544 = vadd.f32 %v542, %v543
        %v545 = vrot.slane %v544, 2
        %v546 = vadd.f32 %v544, %v545
        %v547 = vrot.slane %v546, 1
        %v548 = vadd.f32 %v546, %v547
        %v549 = vmul.f32 %v548, %v526
        %v550 = vadd.f32 %v549, 1e-06
        %v551 = vrsqrt.pop %v550
        %v552 = vld [vmem:[%s4] sm:$0xff]
        %v553 = vld [vmem:[%s4 + $0x8] sm:$0xff]
        %v554 = vld [vmem:[%s4 + $0x10] sm:$0xff]
        %v555 = vld [vmem:[%s4 + $0x18] sm:$0xff]
        %557 = vset.pattern.permute.xlu0 0
        %558 = vperm.xlu0 %557, %v552
        %v559 = vpop.permute.xlu0 %558
        %562 = vset.pattern.permute.xlu0 0
        %563 = vperm.xlu0 %562, %v553
        %v564 = vpop.permute.xlu0 %563
        %567 = vset.pattern.permute.xlu0 0
        %568 = vperm.xlu0 %567, %v554
        %v569 = vpop.permute.xlu0 %568
        %572 = vset.pattern.permute.xlu0 0
        %573 = vperm.xlu0 %572, %v555
        %v574 = vpop.permute.xlu0 %573
        %v576 = vmul.f32 %v559, %v551
        %v577 = vmul.f32 %v564, %v551
        %v578 = vmul.f32 %v569, %v551
        %v579 = vmul.f32 %v574, %v551
        %v580 = vmul.f32 %v528, %v576
        %v581 = vmul.f32 %v529, %v577
        %v582 = vmul.f32 %v530, %v578
        %v583 = vmul.f32 %v531, %v579
        %v584 = vld [vmem:[%s5] sm:$0xff]
        %v585 = vld [vmem:[%s5 + $0x8] sm:$0xff]
        %v586 = vld [vmem:[%s5 + $0x10] sm:$0xff]
        %v587 = vld [vmem:[%s5 + $0x18] sm:$0xff]
        %589 = vset.pattern.permute.xlu0 0
        %590 = vperm.xlu0 %589, %v584
        %v591 = vpop.permute.xlu0 %590
        %594 = vset.pattern.permute.xlu0 0
        %595 = vperm.xlu0 %594, %v585
        %v596 = vpop.permute.xlu0 %595
        %599 = vset.pattern.permute.xlu0 0
        %600 = vperm.xlu0 %599, %v586
        %v601 = vpop.permute.xlu0 %600
        %604 = vset.pattern.permute.xlu0 0
        %605 = vperm.xlu0 %604, %v587
        %v606 = vpop.permute.xlu0 %605
        %v608 = vadd.f32 %v580, %v591
        %v609 = vadd.f32 %v581, %v596
        %v610 = vadd.f32 %v582, %v601
        %v611 = vadd.f32 %v583, %v606
        %612 = vst.msk [vmem:[%s289] sm:$0xff] %vm512, %v608
        %613 = vst.msk [vmem:[%s289 + $0x8] sm:$0xff] %vm512, %v609
        %614 = vst.msk [vmem:[%s289 + $0x10] sm:$0xff] %vm512, %v610
        %615 = vst.msk [vmem:[%s289 + $0x18] sm:$0xff] %vm512, %v611
        %s616 = sand.u32 %s182, 1
        %s617 = scalar_lea.sflag [#allocation3], %s616
        %s618 = sand.u32 %s182, 1
        %s619 = smul.addr %s618, 32
        %s620 = scalar_lea.vmem [#allocation2], %s619
        // Predicated region
        $region45: #{tpu_custom_call.1} parent=43 // pred_check
          %p621 = pneg %p192
        $region46: #{tpu_custom_call.1} parent=43 // pred_check_branch
          %623 = sbr.rel (%p621) target = $region48
        $region47: #{tpu_custom_call.1} parent=43 // pred_region
          %s625 = ssub.s32 512, 512
          %626 = vsyncadd %s617, %s625
          %s627 = smul.addr %s24, 4
          %s628 = sadd.s32 %s25, %s627
          %s629 = smul.addr %s628, 128
          %s630 = scalar_lea.hbm %s6, %s629
          %s631 = sshll.u32 %s620, 4
          %s632 = int_to_ptr.vmem [resolvable:$true] %s631
          %637 = dma.vmem_to_hbm [thread:$0]  %s632, 512, %s630, %s617, 128, 128, 8
        $region48: #{tpu_custom_call.1} parent=43 // pred_fallthru
          _
      $region44: #{tpu_custom_call.1} parent=5 // pred_fallthru
        _
      %p638 = scmp.le.s32.totalorder 2, %s15
      // Predicated region
      $region49: #{tpu_custom_call.1} parent=5 // pred_check
        %p639 = pneg %p638
      $region50: #{tpu_custom_call.1} parent=5 // pred_check_branch
        %641 = sbr.rel (%p639) target = $region52
      $region51: #{tpu_custom_call.1} parent=5 // pred_region
        %s642 = ssub.s32 %s15, 2
        // Predicated region
        $region53: #{tpu_custom_call.1} parent=51 // pred_check
          %p643 = pneg %p198
        $region54: #{tpu_custom_call.1} parent=51 // pred_check_branch
          %645 = sbr.rel (%p643) target = $region56
        $region55: #{tpu_custom_call.1} parent=51 // pred_region
          %s646 = sand.u32 %s183, 1
          %s647 = scalar_lea.sflag [#allocation3], %s646
          %s648 = sand.u32 %s183, 1
          %s649 = smul.addr %s648, 32
          %s650 = scalar_lea.vmem [#allocation2], %s649
          %651 = dma.done %s647, 512
        $region56: #{tpu_custom_call.1} parent=51 // pred_fallthru
          _
      $region52: #{tpu_custom_call.1} parent=5 // pred_fallthru
        _
    $region6: #{tpu_custom_call.1} parent=1 // loop_footer
      %s19 = sadd.s32 1, %s15
    $region7: #{tpu_custom_call.1} parent=1 // loop_footer_branch
      %14 = sbr.rel target = $region3
    $region8: #{tpu_custom_call.1} parent=1 // loop_exit
      _
    %652 = vsyncpa [#allocation3], 1
    %s653 = scalar_lea.sflag [#allocation3], 1
    %654 = vsyncpa %s653, 1

</llo_original>
